<compile_context>
chip_gen: v6e
topology: v6e:2x2x1
jax: 0.10.0
libtpu: 0.0.40
codegen_flags: <defaults>
</compile_context>

<pallas_src>
import functools

import jax
import jax.numpy as jnp
from jax import lax
from jax.experimental import pallas as pl
from jax.experimental.pallas import tpu as pltpu

_LANE = 128              # lane width: keep output stores lane-dense
_K_ALIGN = 256           # MXU K alignment for v6e/v7x (2x256x256); fine on v5e
_MAX_ONEHOT_COLS = 2048  # bound on the (tile x K) one-hot / iota intermediates


def _round_up(x, m):
    return (x + m - 1) // m * m


def _vmem_budget_bytes():
    """~75% of per-core VMEM: ~96 MiB on v5e/v6e, ~48 MiB on v7x."""
    try:
        cap = int(pltpu.get_tpu_info().vmem_capacity_bytes)
    except Exception:
        cap = 64 << 20  # conservative fallback (v7x per-core VMEM)
    return (cap * 3) // 4


def _pick_divisor_chunk(total, cap):
    """Largest multiple-of-_K_ALIGN divisor of `total` that is <= cap."""
    c = max(_K_ALIGN, (min(cap, total) // _K_ALIGN) * _K_ALIGN)
    while total % c:
        c -= _K_ALIGN
    return c


def pad_codebook(weight):
    """Pad (num_tokens, dim) codebook to (mult of 256, mult of 128).

    Done once per weight update, not per forward, so lookups never re-write a
    padded copy of the codebook to HBM.
    """
    t, d = weight.shape
    tp = max(_K_ALIGN, _round_up(t, _K_ALIGN))
    dp = max(_LANE, _round_up(d, _LANE))
    if (tp, dp) != (t, d):
        weight = jnp.pad(weight, ((0, tp - t), (0, dp - d)))
    return weight


def _gather_kernel_resident(ids_ref, w_ref, out_ref, *, k_sub):
    # ids_ref: (TILE, 1) i32 | w_ref: (Tp, Dp) resident codebook | out: (TILE, Dp)
    tile = ids_ref.shape[0]
    tokens_p, dim_p = w_ref.shape
    ids = ids_ref[...]
    iota = lax.broadcasted_iota(jnp.int32, (tile, k_sub), 1)
    acc = jnp.zeros((tile, dim_p), jnp.float32)
    # Static unroll over K sub-chunks keeps the one-hot bounded to (tile, k_sub).
    for s in range(tokens_p // k_sub):
        onehot = ((ids - s * k_sub) == iota).astype(jnp.float32)     # exact 0/1
        acc = acc + jnp.dot(
            onehot,
            w_ref[pl.ds(s * k_sub, k_sub), :],
            preferred_element_type=jnp.float32,
            precision=lax.Precision.HIGHEST,
        )
    out_ref[...] = acc.astype(out_ref.dtype)


def _gather_kernel_chunked(ids_ref, w_ref, out_ref):
    # Fallback for codebooks too large to stay VMEM-resident: the token axis is
    # the last ("arbitrary") grid axis; accumulate directly into the resident
    # output block (one-hot selection => exactly one nonzero term per row, so
    # accumulation in the output dtype is exact).
    k = pl.program_id(1)

    @pl.when(k == 0)
    def _():
        out_ref[...] = jnp.zeros_like(out_ref)

    tile = ids_ref.shape[0]
    tok_chunk = w_ref.shape[0]
    ids = ids_ref[...]
    iota = lax.broadcasted_iota(jnp.int32, (tile, tok_chunk), 1)
    onehot = ((ids - k * tok_chunk) == iota).astype(jnp.float32)     # exact 0/1
    out_ref[...] += jnp.dot(
        onehot,
        w_ref[...],
        preferred_element_type=jnp.float32,
        precision=lax.Precision.HIGHEST,
    ).astype(out_ref.dtype)


def embedding_lookup(embed_id, weight_padded, *, codebook_dim, max_tile=512):
    """Pallas equivalent of F.embedding(embed_id, weight) on a padded codebook.

    Out-of-range / negative ids yield all-zero rows (F.embedding would error).
    """
    tokens_p, dim_p = weight_padded.shape
    flat = embed_id.reshape(-1).astype(jnp.int32)
    n = flat.shape[0]

    # Index tiling: large tiles amortize per-grid-step overhead; keep >= 2
    # tiles when there is enough work (v7x megacore); shrink for tiny inputs
    # so the common case needs no padding.
    n_tiles_target = max(1, _round_up(n, max_tile) // max_tile)
    if n_tiles_target == 1 and n > 256:
        n_tiles_target = 2
    tile = max(8, _round_up(-(-n // n_tiles_target), 8))
    n_pad = _round_up(n, tile)
    if n_pad != n:
        flat = jnp.pad(flat, (0, n_pad - n))
    ids2d = flat.reshape(n_pad, 1)
    n_tiles = n_pad // tile

    budget = _vmem_budget_bytes()
    onehot_cols = _pick_divisor_chunk(tokens_p, _MAX_ONEHOT_COLS)
    # Per-step VMEM besides the codebook: ids blocks (lane-padded i32, 2 bufs),
    # output blocks (2 bufs), one-hot f32 + i32 iota, f32 accumulator.
    overhead = (
        tile * _LANE * 4 * 2
        + tile * dim_p * 4 * 2
        + tile * onehot_cols * 4 * 2
        + tile * dim_p * 4
    )
    codebook_bytes = tokens_p * dim_p * weight_padded.dtype.itemsize
    resident = codebook_bytes + overhead <= budget

    if resident:
        # Whole codebook resident, single-buffered (constant index_map): it is
        # read from HBM exactly once for the whole call.
        kernel = functools.partial(_gather_kernel_resident, k_sub=onehot_cols)
        grid = (n_tiles,)
        in_specs = [
            pl.BlockSpec((tile, 1), lambda i: (i, 0)),
            pl.BlockSpec((tokens_p, dim_p), lambda i: (0, 0),
                         pipeline_mode=pl.Buffered(1)),
        ]
        out_specs = pl.BlockSpec((tile, dim_p), lambda i: (i, 0))
        dim_sem = ("parallel",)
        est = codebook_bytes + overhead
    else:
        # TODO(synk): for codebooks that cannot be VMEM-resident, a manual-DMA
        # row gather (weight in pl.ANY + double-buffered per-row async copies)
        # would avoid re-streaming the codebook once per index tile.
        token_chunk = onehot_cols
        kernel = _gather_kernel_chunked
        grid = (n_tiles, tokens_p // token_chunk)
        in_specs = [
            pl.BlockSpec((tile, 1), lambda i, k: (i, 0)),
            pl.BlockSpec((token_chunk, dim_p), lambda i, k: (k, 0),
                         pipeline_mode=pl.Buffered(2)),
        ]
        out_specs = pl.BlockSpec((tile, dim_p), lambda i, k: (i, 0))
        dim_sem = ("parallel", "arbitrary")
        est = token_chunk * dim_p * 4 * 2 + overhead

    vmem_limit = int(min(budget, max(32 << 20, 2 * est)))

    out = pl.pallas_call(
        kernel,
        out_shape=jax.ShapeDtypeStruct((n_pad, dim_p), weight_padded.dtype),
        grid_spec=pltpu.PrefetchScalarGridSpec(
            num_scalar_prefetch=0,
            grid=grid,
            in_specs=in_specs,
            out_specs=out_specs,
        ),
        compiler_params=pltpu.CompilerParams(
            dimension_semantics=dim_sem,
            vmem_limit_bytes=vmem_limit,
        ),
    )(ids2d, weight_padded)

    if n_pad != n:
        out = out[:n]
    if dim_p != codebook_dim:
        out = out[:, :codebook_dim]
    return out.reshape(embed_id.shape + (codebook_dim,))


class EmbeddingEMA:
    """JAX port of the PyTorch EmbeddingEMA module (forward on Pallas)."""

    def __init__(self, num_tokens, codebook_dim, decay=0.99, eps=1e-5, key=None):
        self.decay = decay
        self.eps = eps
        self.num_tokens = num_tokens
        self.codebook_dim = codebook_dim
        key = jax.random.PRNGKey(0) if key is None else key
        # torch.randn(num_tokens, codebook_dim) analogue, deterministic.
        weight = jax.random.normal(key, (num_tokens, codebook_dim), dtype=jnp.float32)
        self.weight = weight
        self._weight_padded = pad_codebook(weight)     # padded once, reused per forward
        self.cluster_size = jnp.zeros((num_tokens,), dtype=jnp.float32)
        self.embed_avg = weight
        self.update = True

    def forward(self, embed_id):
        return embedding_lookup(
            embed_id, self._weight_padded, codebook_dim=self.codebook_dim
        )

    # --- EMA bookkeeping (not part of forward; cheap elementwise JAX glue) ---
    def cluster_size_ema_update(self, new_cluster_size):
        self.cluster_size = (
            self.cluster_size * self.decay + new_cluster_size * (1.0 - self.decay)
        )

    def embed_avg_ema_update(self, new_embed_avg):
        self.embed_avg = (
            self.embed_avg * self.decay + new_embed_avg * (1.0 - self.decay)
        )

    def weight_update(self, num_tokens):
        n = self.cluster_size.sum()
        smoothed = (self.cluster_size + self.eps) / (n + num_tokens * self.eps) * n
        self.weight = self.embed_avg / smoothed[:, None]
        self._weight_padded = pad_codebook(self.weight)   # re-pad once per update

    # TODO(synk): `reinit` uses data-dependent per-row in-place uniform re-init;
    # no clean Pallas hot-path equivalent, left as plain-JAX if ever needed.


if __name__ == "__main__":
    key = jax.random.PRNGKey(0)
    k_w, k_ids = jax.random.split(key)

    num_tokens = 256
    codebook_dim = 128

    module = EmbeddingEMA(num_tokens, codebook_dim, key=k_w)

    # Indices as produced by a VQ bottleneck: (batch=2, h=16, w=16) token ids
    # -> 512 flattened ids = two 256-row tiles (megacore-friendly), no padding.
    embed_id = jax.random.randint(
        k_ids, shape=(2, 16, 16), minval=0, maxval=num_tokens, dtype=jnp.int32
    )

    out = module.forward(embed_id)
    out = jax.block_until_ready(out)

    # Reference check against a plain-JAX gather.
    ref = jnp.take(module.weight, embed_id, axis=0)
    assert out.shape == embed_id.shape + (codebook_dim,), out.shape
    assert out.dtype == module.weight.dtype, out.dtype
    assert jnp.allclose(out, ref, atol=1e-5, rtol=1e-5), "mismatch vs reference gather"

    print("KERNEL_OK")
</pallas_src>

<mosaic_0001>
module attributes {stable_mosaic.version = 11 : i64} {
  func.func @_gather_kernel_resident(%arg0: i32, %arg1: memref<256x1xi32, #tpu.memory_space<vmem>>, %arg2: memref<256x128xf32, #tpu.memory_space<vmem>>, %arg3: memref<256x128xf32, #tpu.memory_space<vmem>>) attributes {dimension_semantics = [#tpu.dimension_semantics<parallel>], iteration_bounds = array<i64: 2>, scalar_prefetch = 0 : i64, scratch_operands = 0 : i64, tpu.core_type = #tpu.core_type<tc>, window_params = [{transform_indices = @transform_0, window_bounds = array<i64: 256, 1>}, {pipeline_mode = #tpu.pipeline_mode<synchronous>, transform_indices = @transform_1, window_bounds = array<i64: 256, 128>}, {transform_indices = @transform_2, window_bounds = array<i64: 256, 128>}]} {
    %c0 = arith.constant 0 : index
    %c0_0 = arith.constant 0 : index
    %0 = vector.load %arg1[%c0, %c0_0] : memref<256x1xi32, #tpu.memory_space<vmem>>, vector<256x1xi32>
    %1 = tpu.iota {dimensions = array<i32: 1>} : vector<256x256xi32>
    %cst = arith.constant 0.000000e+00 : f32
    %2 = vector.broadcast %cst : f32 to vector<256x128xf32>
    %c0_i32 = arith.constant 0 : i32
    %3 = vector.broadcast %c0_i32 : i32 to vector<256x1xi32>
    %4 = arith.subi %0, %3 : vector<256x1xi32>
    %5 = vector.broadcast %4 : vector<256x1xi32> to vector<256x256xi32>
    %6 = arith.cmpi eq, %5, %1 : vector<256x256xi32>
    %7 = arith.extui %6 : vector<256x256xi1> to vector<256x256xi32>
    %8 = arith.sitofp %7 : vector<256x256xi32> to vector<256x256xf32>
    %c0_1 = arith.constant 0 : index
    %c0_2 = arith.constant 0 : index
    %9 = vector.load %arg2[%c0_1, %c0_2] : memref<256x128xf32, #tpu.memory_space<vmem>>, vector<256x128xf32>
    %cst_3 = arith.constant dense<0.000000e+00> : vector<256x128xf32>
    %10 = tpu.matmul %8, %9, %cst_3 {dimension_numbers = #tpu.dot_dimension_numbers<[1], [0], [0], [1], [0, 0, 1, 1], [], []>, precision = #tpu.contract_precision<fp32>} : vector<256x256xf32>, vector<256x128xf32>, vector<256x128xf32> -> vector<256x128xf32>
    %11 = arith.addf %2, %10 : vector<256x128xf32>
    %c0_4 = arith.constant 0 : index
    %c0_5 = arith.constant 0 : index
    %12 = vector.load %arg3[%c0_4, %c0_5] : memref<256x128xf32, #tpu.memory_space<vmem>>, vector<256x128xf32>
    tpu.vector_store %arg3[%c0_4, %c0_5], %11 {strides = array<i32>} : memref<256x128xf32, #tpu.memory_space<vmem>>, vector<256x128xf32>,
    return
  }
  func.func @transform_0(%arg0: i32) -> (i32, i32) {
    %c0_i32 = arith.constant 0 : i32
    %c0_i32_0 = arith.constant 0 : i32
    return %arg0, %c0_i32 : i32, i32
  }
  func.func @transform_1(%arg0: i32) -> (i32, i32) {
    %c0_i32 = arith.constant 0 : i32
    %c0_i32_0 = arith.constant 0 : i32
    %c0_i32_1 = arith.constant 0 : i32
    return %c0_i32, %c0_i32_0 : i32, i32
  }
  func.func @transform_2(%arg0: i32) -> (i32, i32) {
    %c0_i32 = arith.constant 0 : i32
    %c0_i32_0 = arith.constant 0 : i32
    return %arg0, %c0_i32 : i32, i32
  }
}

</mosaic_0001>

<llo_original>
// kernel: tpu_custom_call.1
$region0: #{tpu_custom_call.1}
  #allocation0 [shape = 'u32[]', space=smem, size = 0x4, offset = 0x4, fixed_abs, tag = 'smem constant byte address 0x4 - core index']
  #allocation1 [shape = 'u32[144,128]{1,0:T(1,128)}', space=vmem, size = 0x12000, scoped, tag = 'internal scratch']
  %s0 = inlined_call_operand.vmem [shape: s32[512,1], index: 0, kind: input, shape index: {}]
  %s1 = inlined_call_operand.vmem [shape: f32[256,128], index: 1, kind: input, shape index: {}]
  %s2 = inlined_call_operand.hbm [shape: f32[512,128], index: 2, kind: output, shape index: {}]
  %s3 = sld [smem:[#allocation0]]
  $region41: #{tpu_custom_call.1} parent=0
    _
  %s5 = ssub.s32 1, %s3
  %s6 = scalar_select 0, %s5, %s3
  $region1: #{tpu_custom_call.1} parent=0
    #allocation2 [shape = 'u8[262144]{0}', space=vmem, size = 0x40000, scoped, tag = 'output window, operand 0']
    #allocation3 [shape = 's32[2]{0}', space=sflag, size = 0x8, scoped, tag = 'scoped memory for tpu_custom_call.1']
    %7 = vsyncpa [#allocation3], 0
    %s8 = scalar_lea.sflag [#allocation3], 1
    %9 = vsyncpa %s8, 0
    loop: start=0, step=1, limit=4
    $region2: #{tpu_custom_call.1} parent=1 // loop_pre_header
      _
    $region3: #{tpu_custom_call.1} parent=1 // loop_header
      %s11 = sphi 0, %s15
      %p12 = scmp.ge.s32.totalorder %s11, 4
      %s21 = sphi 0, %s23
      %s24 = sphi 0, %s21
      %s25 = sphi 0, %s24
      %s41 = sphi 0, %s25
      %s45 = sphi 0, %s45
      %s47 = sphi 0, %s45
      %s48 = sphi 0, %s47
      %s62 = sphi 0, %s48
      %s68 = sphi 0, %s70
      %s71 = sphi 0, %s68
      %s72 = sphi 0, %s71
      %s88 = sphi 0, %s72
    $region4: #{tpu_custom_call.1} parent=1 // loop_header_branch
      %14 = sbr.rel (%p12) target = $region8
    $region5: #{tpu_custom_call.1} parent=1 // loop_body
      %s16 = ssub.s32 %s11, 1
      %s17 = ssub.s32 %s11, 2
      %s18 = sadd.s32 %s11, 1
      %s19 = ssub.s32 %s11, %s18
      %p20 = scmp.eq.s32.totalorder %s19, 0
      %s22 = sadd.s32 %s21, 1
      %s23 = scalar_select %p20, %s21, %s22
      %p26 = pneg %p20
      %p27 = scmp.eq.s32.totalorder %s11, 1
      %p28 = por %p26, %p27
      %p29 = scmp.ne.s32.totalorder %s21, %s24
      %p30 = scmp.eq.s32.totalorder %s11, 0
      %p31 = por %p29, %p30
      %p32 = scmp.ne.s32.totalorder %s21, %s24
      %p33 = scmp.eq.s32.totalorder %s16, 1
      %p34 = por %p32, %p33
      %p35 = scmp.ne.s32.totalorder %s24, %s25
      %p36 = scmp.eq.s32.totalorder %s16, 0
      %p37 = por %p35, %p36
      %p38 = scmp.ne.s32.totalorder %s24, %s25
      %p39 = scmp.eq.s32.totalorder %s17, 1
      %p40 = por %p38, %p39
      %p42 = scmp.ne.s32.totalorder %s25, %s41
      %p43 = scmp.eq.s32.totalorder %s17, 0
      %p44 = por %p42, %p43
      %s46 = sadd.s32 %s45, 1
      %p49 = scmp.eq.s32.totalorder %s11, 1
      %p50 = scmp.ne.s32.totalorder %s45, %s47
      %p51 = scmp.eq.s32.totalorder %s11, 0
      %p52 = por %p50, %p51
      %p53 = scmp.ne.s32.totalorder %s45, %s47
      %p54 = scmp.eq.s32.totalorder %s16, 1
      %p55 = por %p53, %p54
      %p56 = scmp.ne.s32.totalorder %s47, %s48
      %p57 = scmp.eq.s32.totalorder %s16, 0
      %p58 = por %p56, %p57
      %p59 = scmp.ne.s32.totalorder %s47, %s48
      %p60 = scmp.eq.s32.totalorder %s17, 1
      %p61 = por %p59, %p60
      %p63 = scmp.ne.s32.totalorder %s48, %s62
      %p64 = scmp.eq.s32.totalorder %s17, 0
      %p65 = por %p63, %p64
      %s66 = ssub.s32 %s11, %s18
      %p67 = scmp.eq.s32.totalorder %s66, 0
      %s69 = sadd.s32 %s68, 1
      %s70 = scalar_select %p67, %s68, %s69
      %p73 = pneg %p67
      %p74 = scmp.eq.s32.totalorder %s11, 1
      %p75 = por %p73, %p74
      %p76 = scmp.ne.s32.totalorder %s68, %s71
      %p77 = scmp.eq.s32.totalorder %s11, 0
      %p78 = por %p76, %p77
      %p79 = scmp.ne.s32.totalorder %s68, %s71
      %p80 = scmp.eq.s32.totalorder %s16, 1
      %p81 = por %p79, %p80
      %p82 = scmp.ne.s32.totalorder %s71, %s72
      %p83 = scmp.eq.s32.totalorder %s16, 0
      %p84 = por %p82, %p83
      %p85 = scmp.ne.s32.totalorder %s71, %s72
      %p86 = scmp.eq.s32.totalorder %s17, 1
      %p87 = por %p85, %p86
      %p89 = scmp.ne.s32.totalorder %s72, %s88
      %p90 = scmp.eq.s32.totalorder %s17, 0
      %p91 = por %p89, %p90
      %p92 = scmp.le.s32.totalorder 1, %s11
      %p93 = scmp.lt.s32.totalorder %s11, 3
      %p94 = pnand %p92, %p93
      %p95 = pneg %p94
      // Predicated region
      $region9: #{tpu_custom_call.1} parent=5 // pred_check
        _
      $region10: #{tpu_custom_call.1} parent=5 // pred_check_branch
        %97 = sbr.rel (%p94) target = $region12
      $region11: #{tpu_custom_call.1} parent=5 // pred_region
        %s98 = ssub.s32 %s11, 1
        // Predicated region
        $region13: #{tpu_custom_call.1} parent=11 // pred_check
          %p99 = pneg %p58
        $region14: #{tpu_custom_call.1} parent=11 // pred_check_branch
          %101 = sbr.rel (%p99) target = $region16
        $region15: #{tpu_custom_call.1} parent=11 // pred_region
          _
        $region16: #{tpu_custom_call.1} parent=11 // pred_fallthru
          _
      $region12: #{tpu_custom_call.1} parent=5 // pred_fallthru
        _
      %p102 = scmp.lt.s32.totalorder %s11, 2
      // Predicated region
      $region17: #{tpu_custom_call.1} parent=5 // pred_check
        %p103 = pneg %p102
      $region18: #{tpu_custom_call.1} parent=5 // pred_check_branch
        %105 = sbr.rel (%p103) target = $region20
      $region19: #{tpu_custom_call.1} parent=5 // pred_region
        // Predicated region
        $region21: #{tpu_custom_call.1} parent=19 // pred_check
          %p106 = pneg %p31
        $region22: #{tpu_custom_call.1} parent=19 // pred_check_branch
          %108 = sbr.rel (%p106) target = $region24
        $region23: #{tpu_custom_call.1} parent=19 // pred_region
          %s109 = smul.u32 32, %s11
          %p110 = scmp.lt.s32.totalorder %s109, 63
          %s111 = scalar_select %p110, %s109, 63
          %s112 = smul.addr %s111, 8
          %s113 = scalar_lea.vmem %s0, %s112
          %s114 = smul.u32 32, %s11
        $region24: #{tpu_custom_call.1} parent=19 // pred_fallthru
          _
      $region20: #{tpu_custom_call.1} parent=5 // pred_fallthru
        _
      %p115 = scmp.le.s32.totalorder 1, %s11
      %p116 = scmp.lt.s32.totalorder %s11, 3
      %p117 = pnand %p115, %p116
      %p118 = pneg %p117
      // Predicated region
      $region25: #{tpu_custom_call.1} parent=5 // pred_check
        _
      $region26: #{tpu_custom_call.1} parent=5 // pred_check_branch
        %120 = sbr.rel (%p117) target = $region28
      $region27: #{tpu_custom_call.1} parent=5 // pred_region
        %s121 = ssub.s32 %s11, 1
        %s122 = smul.u32 32, %s16
        %p123 = scmp.lt.s32.totalorder %s122, 63
        %s124 = scalar_select %p123, %s122, 63
        %s125 = smul.addr %s124, 8
        %s126 = scalar_lea.vmem %s0, %s125
        %p127 = pneg %p37
        %p128 = pneg %p34
        %p129 = pneg %p58
        %p130 = pneg %p55
        %p131 = pneg %p84
        %p132 = pneg %p81
        %s133 = sand.u32 %s71, 1
        %s134 = scalar_lea.sflag [#allocation3], %s133
        %s135 = sand.u32 %s71, 1
        %s136 = smul.addr %s135, 256
        %s137 = scalar_lea.vmem [#allocation2], %s136
        %s138 = smul.u32 32, %s16
        %p139 = scmp.lt.s32.totalorder %s138, 63
        %s140 = scalar_select %p139, %s138, 63
        %s141 = smul.addr %s140, 8
        %s142 = scalar_lea.vmem %s0, %s141
        %s143 = smul.u32 32, %s16
        %s144 = smul.u32 32, %s16
        %v145 = vld [vmem:[%s142] sm:$0xff]
        %v146 = vld [vmem:[%s142 + $0x8] sm:$0xff]
        %v147 = vld [vmem:[%s142 + $0x10] sm:$0xff]
        %v148 = vld [vmem:[%s142 + $0x18] sm:$0xff]
        %v149 = vld [vmem:[%s142 + $0x20] sm:$0xff]
        %v150 = vld [vmem:[%s142 + $0x28] sm:$0xff]
        %v151 = vld [vmem:[%s142 + $0x30] sm:$0xff]
        %v152 = vld [vmem:[%s142 + $0x38] sm:$0xff]
        %v153 = vld [vmem:[%s142 + $0x40] sm:$0xff]
        %v154 = vld [vmem:[%s142 + $0x48] sm:$0xff]
        %v155 = vld [vmem:[%s142 + $0x50] sm:$0xff]
        %v156 = vld [vmem:[%s142 + $0x58] sm:$0xff]
        %v157 = vld [vmem:[%s142 + $0x60] sm:$0xff]
        %v158 = vld [vmem:[%s142 + $0x68] sm:$0xff]
        %v159 = vld [vmem:[%s142 + $0x70] sm:$0xff]
        %v160 = vld [vmem:[%s142 + $0x78] sm:$0xff]
        %v161 = vld [vmem:[%s142 + $0x80] sm:$0xff]
        %v162 = vld [vmem:[%s142 + $0x88] sm:$0xff]
        %v163 = vld [vmem:[%s142 + $0x90] sm:$0xff]
        %v164 = vld [vmem:[%s142 + $0x98] sm:$0xff]
        %v165 = vld [vmem:[%s142 + $0xa0] sm:$0xff]
        %v166 = vld [vmem:[%s142 + $0xa8] sm:$0xff]
        %v167 = vld [vmem:[%s142 + $0xb0] sm:$0xff]
        %v168 = vld [vmem:[%s142 + $0xb8] sm:$0xff]
        %v169 = vld [vmem:[%s142 + $0xc0] sm:$0xff]
        %v170 = vld [vmem:[%s142 + $0xc8] sm:$0xff]
        %v171 = vld [vmem:[%s142 + $0xd0] sm:$0xff]
        %v172 = vld [vmem:[%s142 + $0xd8] sm:$0xff]
        %v173 = vld [vmem:[%s142 + $0xe0] sm:$0xff]
        %v174 = vld [vmem:[%s142 + $0xe8] sm:$0xff]
        %v175 = vld [vmem:[%s142 + $0xf0] sm:$0xff]
        %v176 = vld [vmem:[%s142 + $0xf8] sm:$0xff]
        %v177 = vlaneseq
        %v178 = vand.u32 %v177, 127
        %v179 = vadd.s32 %v178, 128
        %180 = vset.pattern.permute.xlu0 0
        %181 = vperm.xlu0 %180, %v145
        %v182 = vpop.permute.xlu0 %181
        %183 = vset.pattern.permute.xlu0 0
        %184 = vperm.xlu0 %183, %v146
        %v185 = vpop.permute.xlu0 %184
        %186 = vset.pattern.permute.xlu0 0
        %187 = vperm.xlu0 %186, %v147
        %v188 = vpop.permute.xlu0 %187
        %189 = vset.pattern.permute.xlu0 0
        %190 = vperm.xlu0 %189, %v148
        %v191 = vpop.permute.xlu0 %190
        %192 = vset.pattern.permute.xlu0 0
        %193 = vperm.xlu0 %192, %v149
        %v194 = vpop.permute.xlu0 %193
        %195 = vset.pattern.permute.xlu0 0
        %196 = vperm.xlu0 %195, %v150
        %v197 = vpop.permute.xlu0 %196
        %198 = vset.pattern.permute.xlu0 0
        %199 = vperm.xlu0 %198, %v151
        %v200 = vpop.permute.xlu0 %199
        %201 = vset.pattern.permute.xlu0 0
        %202 = vperm.xlu0 %201, %v152
        %v203 = vpop.permute.xlu0 %202
        %204 = vset.pattern.permute.xlu0 0
        %205 = vperm.xlu0 %204, %v153
        %v206 = vpop.permute.xlu0 %205
        %207 = vset.pattern.permute.xlu0 0
        %208 = vperm.xlu0 %207, %v154
        %v209 = vpop.permute.xlu0 %208
        %210 = vset.pattern.permute.xlu0 0
        %211 = vperm.xlu0 %210, %v155
        %v212 = vpop.permute.xlu0 %211
        %213 = vset.pattern.permute.xlu0 0
        %214 = vperm.xlu0 %213, %v156
        %v215 = vpop.permute.xlu0 %214
        %216 = vset.pattern.permute.xlu0 0
        %217 = vperm.xlu0 %216, %v157
        %v218 = vpop.permute.xlu0 %217
        %219 = vset.pattern.permute.xlu0 0
        %220 = vperm.xlu0 %219, %v158
        %v221 = vpop.permute.xlu0 %220
        %222 = vset.pattern.permute.xlu0 0
        %223 = vperm.xlu0 %222, %v159
        %v224 = vpop.permute.xlu0 %223
        %225 = vset.pattern.permute.xlu0 0
        %226 = vperm.xlu0 %225, %v160
        %v227 = vpop.permute.xlu0 %226
        %228 = vset.pattern.permute.xlu0 0
        %229 = vperm.xlu0 %228, %v161
        %v230 = vpop.permute.xlu0 %229
        %231 = vset.pattern.permute.xlu0 0
        %232 = vperm.xlu0 %231, %v162
        %v233 = vpop.permute.xlu0 %232
        %234 = vset.pattern.permute.xlu0 0
        %235 = vperm.xlu0 %234, %v163
        %v236 = vpop.permute.xlu0 %235
        %237 = vset.pattern.permute.xlu0 0
        %238 = vperm.xlu0 %237, %v164
        %v239 = vpop.permute.xlu0 %238
        %240 = vset.pattern.permute.xlu0 0
        %241 = vperm.xlu0 %240, %v165
        %v242 = vpop.permute.xlu0 %241
        %243 = vset.pattern.permute.xlu0 0
        %244 = vperm.xlu0 %243, %v166
        %v245 = vpop.permute.xlu0 %244
        %246 = vset.pattern.permute.xlu0 0
        %247 = vperm.xlu0 %246, %v167
        %v248 = vpop.permute.xlu0 %247
        %249 = vset.pattern.permute.xlu0 0
        %250 = vperm.xlu0 %249, %v168
        %v251 = vpop.permute.xlu0 %250
        %252 = vset.pattern.permute.xlu0 0
        %253 = vperm.xlu0 %252, %v169
        %v254 = vpop.permute.xlu0 %253
        %255 = vset.pattern.permute.xlu0 0
        %256 = vperm.xlu0 %255, %v170
        %v257 = vpop.permute.xlu0 %256
        %258 = vset.pattern.permute.xlu0 0
        %259 = vperm.xlu0 %258, %v171
        %v260 = vpop.permute.xlu0 %259
        %261 = vset.pattern.permute.xlu0 0
        %262 = vperm.xlu0 %261, %v172
        %v263 = vpop.permute.xlu0 %262
        %264 = vset.pattern.permute.xlu0 0
        %265 = vperm.xlu0 %264, %v173
        %v266 = vpop.permute.xlu0 %265
        %267 = vset.pattern.permute.xlu0 0
        %268 = vperm.xlu0 %267, %v174
        %v269 = vpop.permute.xlu0 %268
        %270 = vset.pattern.permute.xlu0 0
        %271 = vperm.xlu0 %270, %v175
        %v272 = vpop.permute.xlu0 %271
        %273 = vset.pattern.permute.xlu0 0
        %274 = vperm.xlu0 %273, %v176
        %v275 = vpop.permute.xlu0 %274
        %vm276 = vcmp.eq.s32.totalorder %v182, %v178
        %vm277 = vcmp.eq.s32.totalorder %v182, %v179
        %vm278 = vcmp.eq.s32.totalorder %v185, %v178
        %vm279 = vcmp.eq.s32.totalorder %v185, %v179
        %vm280 = vcmp.eq.s32.totalorder %v188, %v178
        %vm281 = vcmp.eq.s32.totalorder %v188, %v179
        %vm282 = vcmp.eq.s32.totalorder %v191, %v178
        %vm283 = vcmp.eq.s32.totalorder %v191, %v179
        %vm284 = vcmp.eq.s32.totalorder %v194, %v178
        %vm285 = vcmp.eq.s32.totalorder %v194, %v179
        %vm286 = vcmp.eq.s32.totalorder %v197, %v178
        %vm287 = vcmp.eq.s32.totalorder %v197, %v179
        %vm288 = vcmp.eq.s32.totalorder %v200, %v178
        %vm289 = vcmp.eq.s32.totalorder %v200, %v179
        %vm290 = vcmp.eq.s32.totalorder %v203, %v178
        %vm291 = vcmp.eq.s32.totalorder %v203, %v179
        %vm292 = vcmp.eq.s32.totalorder %v206, %v178
        %vm293 = vcmp.eq.s32.totalorder %v206, %v179
        %vm294 = vcmp.eq.s32.totalorder %v209, %v178
        %vm295 = vcmp.eq.s32.totalorder %v209, %v179
        %vm296 = vcmp.eq.s32.totalorder %v212, %v178
        %vm297 = vcmp.eq.s32.totalorder %v212, %v179
        %vm298 = vcmp.eq.s32.totalorder %v215, %v178
        %vm299 = vcmp.eq.s32.totalorder %v215, %v179
        %vm300 = vcmp.eq.s32.totalorder %v218, %v178
        %vm301 = vcmp.eq.s32.totalorder %v218, %v179
        %vm302 = vcmp.eq.s32.totalorder %v221, %v178
        %vm303 = vcmp.eq.s32.totalorder %v221, %v179
        %vm304 = vcmp.eq.s32.totalorder %v224, %v178
        %vm305 = vcmp.eq.s32.totalorder %v224, %v179
        %vm306 = vcmp.eq.s32.totalorder %v227, %v178
        %vm307 = vcmp.eq.s32.totalorder %v227, %v179
        %vm308 = vcmp.eq.s32.totalorder %v230, %v178
        %vm309 = vcmp.eq.s32.totalorder %v230, %v179
        %vm310 = vcmp.eq.s32.totalorder %v233, %v178
        %vm311 = vcmp.eq.s32.totalorder %v233, %v179
        %vm312 = vcmp.eq.s32.totalorder %v236, %v178
        %vm313 = vcmp.eq.s32.totalorder %v236, %v179
        %vm314 = vcmp.eq.s32.totalorder %v239, %v178
        %vm315 = vcmp.eq.s32.totalorder %v239, %v179
        %vm316 = vcmp.eq.s32.totalorder %v242, %v178
        %vm317 = vcmp.eq.s32.totalorder %v242, %v179
        %vm318 = vcmp.eq.s32.totalorder %v245, %v178
        %vm319 = vcmp.eq.s32.totalorder %v245, %v179
        %vm320 = vcmp.eq.s32.totalorder %v248, %v178
        %vm321 = vcmp.eq.s32.totalorder %v248, %v179
        %vm322 = vcmp.eq.s32.totalorder %v251, %v178
        %vm323 = vcmp.eq.s32.totalorder %v251, %v179
        %vm324 = vcmp.eq.s32.totalorder %v254, %v178
        %vm325 = vcmp.eq.s32.totalorder %v254, %v179
        %vm326 = vcmp.eq.s32.totalorder %v257, %v178
        %vm327 = vcmp.eq.s32.totalorder %v257, %v179
        %vm328 = vcmp.eq.s32.totalorder %v260, %v178
        %vm329 = vcmp.eq.s32.totalorder %v260, %v179
        %vm330 = vcmp.eq.s32.totalorder %v263, %v178
        %vm331 = vcmp.eq.s32.totalorder %v263, %v179
        %vm332 = vcmp.eq.s32.totalorder %v266, %v178
        %vm333 = vcmp.eq.s32.totalorder %v266, %v179
        %vm334 = vcmp.eq.s32.totalorder %v269, %v178
        %vm335 = vcmp.eq.s32.totalorder %v269, %v179
        %vm336 = vcmp.eq.s32.totalorder %v272, %v178
        %vm337 = vcmp.eq.s32.totalorder %v272, %v179
        %vm338 = vcmp.eq.s32.totalorder %v275, %v178
        %vm339 = vcmp.eq.s32.totalorder %v275, %v179
        %v340 = vsel %vm276, 1, 0
        %v341 = vsel %vm277, 1, 0
        %v342 = vsel %vm278, 1, 0
        %v343 = vsel %vm279, 1, 0
        %v344 = vsel %vm280, 1, 0
        %v345 = vsel %vm281, 1, 0
        %v346 = vsel %vm282, 1, 0
        %v347 = vsel %vm283, 1, 0
        %v348 = vsel %vm284, 1, 0
        %v349 = vsel %vm285, 1, 0
        %v350 = vsel %vm286, 1, 0
        %v351 = vsel %vm287, 1, 0
        %v352 = vsel %vm288, 1, 0
        %v353 = vsel %vm289, 1, 0
        %v354 = vsel %vm290, 1, 0
        %v355 = vsel %vm291, 1, 0
        %v356 = vsel %vm292, 1, 0
        %v357 = vsel %vm293, 1, 0
        %v358 = vsel %vm294, 1, 0
        %v359 = vsel %vm295, 1, 0
        %v360 = vsel %vm296, 1, 0
        %v361 = vsel %vm297, 1, 0
        %v362 = vsel %vm298, 1, 0
        %v363 = vsel %vm299, 1, 0
        %v364 = vsel %vm300, 1, 0
        %v365 = vsel %vm301, 1, 0
        %v366 = vsel %vm302, 1, 0
        %v367 = vsel %vm303, 1, 0
        %v368 = vsel %vm304, 1, 0
        %v369 = vsel %vm305, 1, 0
        %v370 = vsel %vm306, 1, 0
        %v371 = vsel %vm307, 1, 0
        %v372 = vsel %vm308, 1, 0
        %v373 = vsel %vm309, 1, 0
        %v374 = vsel %vm310, 1, 0
        %v375 = vsel %vm311, 1, 0
        %v376 = vsel %vm312, 1, 0
        %v377 = vsel %vm313, 1, 0
        %v378 = vsel %vm314, 1, 0
        %v379 = vsel %vm315, 1, 0
        %v380 = vsel %vm316, 1, 0
        %v381 = vsel %vm317, 1, 0
        %v382 = vsel %vm318, 1, 0
        %v383 = vsel %vm319, 1, 0
        %v384 = vsel %vm320, 1, 0
        %v385 = vsel %vm321, 1, 0
        %v386 = vsel %vm322, 1, 0
        %v387 = vsel %vm323, 1, 0
        %v388 = vsel %vm324, 1, 0
        %v389 = vsel %vm325, 1, 0
        %v390 = vsel %vm326, 1, 0
        %v391 = vsel %vm327, 1, 0
        %v392 = vsel %vm328, 1, 0
        %v393 = vsel %vm329, 1, 0
        %v394 = vsel %vm330, 1, 0
        %v395 = vsel %vm331, 1, 0
        %v396 = vsel %vm332, 1, 0
        %v397 = vsel %vm333, 1, 0
        %v398 = vsel %vm334, 1, 0
        %v399 = vsel %vm335, 1, 0
        %v400 = vsel %vm336, 1, 0
        %v401 = vsel %vm337, 1, 0
        %v402 = vsel %vm338, 1, 0
        %v403 = vsel %vm339, 1, 0
        %v404 = vcvt.s32.f32 %v340
        %v405 = vcvt.s32.f32 %v341
        %v406 = vcvt.s32.f32 %v342
        %v407 = vcvt.s32.f32 %v343
        %v408 = vcvt.s32.f32 %v344
        %v409 = vcvt.s32.f32 %v345
        %v410 = vcvt.s32.f32 %v346
        %v411 = vcvt.s32.f32 %v347
        %v412 = vcvt.s32.f32 %v348
        %v413 = vcvt.s32.f32 %v349
        %v414 = vcvt.s32.f32 %v350
        %v415 = vcvt.s32.f32 %v351
        %v416 = vcvt.s32.f32 %v352
        %v417 = vcvt.s32.f32 %v353
        %v418 = vcvt.s32.f32 %v354
        %v419 = vcvt.s32.f32 %v355
        %v420 = vcvt.s32.f32 %v356
        %v421 = vcvt.s32.f32 %v357
        %v422 = vcvt.s32.f32 %v358
        %v423 = vcvt.s32.f32 %v359
        %v424 = vcvt.s32.f32 %v360
        %v425 = vcvt.s32.f32 %v361
        %v426 = vcvt.s32.f32 %v362
        %v427 = vcvt.s32.f32 %v363
        %v428 = vcvt.s32.f32 %v364
        %v429 = vcvt.s32.f32 %v365
        %v430 = vcvt.s32.f32 %v366
        %v431 = vcvt.s32.f32 %v367
        %v432 = vcvt.s32.f32 %v368
        %v433 = vcvt.s32.f32 %v369
        %v434 = vcvt.s32.f32 %v370
        %v435 = vcvt.s32.f32 %v371
        %v436 = vcvt.s32.f32 %v372
        %v437 = vcvt.s32.f32 %v373
        %v438 = vcvt.s32.f32 %v374
        %v439 = vcvt.s32.f32 %v375
        %v440 = vcvt.s32.f32 %v376
        %v441 = vcvt.s32.f32 %v377
        %v442 = vcvt.s32.f32 %v378
        %v443 = vcvt.s32.f32 %v379
        %v444 = vcvt.s32.f32 %v380
        %v445 = vcvt.s32.f32 %v381
        %v446 = vcvt.s32.f32 %v382
        %v447 = vcvt.s32.f32 %v383
        %v448 = vcvt.s32.f32 %v384
        %v449 = vcvt.s32.f32 %v385
        %v450 = vcvt.s32.f32 %v386
        %v451 = vcvt.s32.f32 %v387
        %v452 = vcvt.s32.f32 %v388
        %v453 = vcvt.s32.f32 %v389
        %v454 = vcvt.s32.f32 %v390
        %v455 = vcvt.s32.f32 %v391
        %v456 = vcvt.s32.f32 %v392
        %v457 = vcvt.s32.f32 %v393
        %v458 = vcvt.s32.f32 %v394
        %v459 = vcvt.s32.f32 %v395
        %v460 = vcvt.s32.f32 %v396
        %v461 = vcvt.s32.f32 %v397
        %v462 = vcvt.s32.f32 %v398
        %v463 = vcvt.s32.f32 %v399
        %v464 = vcvt.s32.f32 %v400
        %v465 = vcvt.s32.f32 %v401
        %v466 = vcvt.s32.f32 %v402
        %v467 = vcvt.s32.f32 %v403
        %v468 = vld [vmem:[%s1] sm:$0xff]
        %v469 = vld [vmem:[%s1 + $0x8] sm:$0xff]
        %v470 = vld [vmem:[%s1 + $0x10] sm:$0xff]
        %v471 = vld [vmem:[%s1 + $0x18] sm:$0xff]
        %v472 = vld [vmem:[%s1 + $0x20] sm:$0xff]
        %v473 = vld [vmem:[%s1 + $0x28] sm:$0xff]
        %v474 = vld [vmem:[%s1 + $0x30] sm:$0xff]
        %v475 = vld [vmem:[%s1 + $0x38] sm:$0xff]
        %v476 = vld [vmem:[%s1 + $0x40] sm:$0xff]
        %v477 = vld [vmem:[%s1 + $0x48] sm:$0xff]
        %v478 = vld [vmem:[%s1 + $0x50] sm:$0xff]
        %v479 = vld [vmem:[%s1 + $0x58] sm:$0xff]
        %v480 = vld [vmem:[%s1 + $0x60] sm:$0xff]
        %v481 = vld [vmem:[%s1 + $0x68] sm:$0xff]
        %v482 = vld [vmem:[%s1 + $0x70] sm:$0xff]
        %v483 = vld [vmem:[%s1 + $0x78] sm:$0xff]
        %v484 = vld [vmem:[%s1 + $0x80] sm:$0xff]
        %v485 = vld [vmem:[%s1 + $0x88] sm:$0xff]
        %v486 = vld [vmem:[%s1 + $0x90] sm:$0xff]
        %v487 = vld [vmem:[%s1 + $0x98] sm:$0xff]
        %v488 = vld [vmem:[%s1 + $0xa0] sm:$0xff]
        %v489 = vld [vmem:[%s1 + $0xa8] sm:$0xff]
        %v490 = vld [vmem:[%s1 + $0xb0] sm:$0xff]
        %v491 = vld [vmem:[%s1 + $0xb8] sm:$0xff]
        %v492 = vld [vmem:[%s1 + $0xc0] sm:$0xff]
        %v493 = vld [vmem:[%s1 + $0xc8] sm:$0xff]
        %v494 = vld [vmem:[%s1 + $0xd0] sm:$0xff]
        %v495 = vld [vmem:[%s1 + $0xd8] sm:$0xff]
        %v496 = vld [vmem:[%s1 + $0xe0] sm:$0xff]
        %v497 = vld [vmem:[%s1 + $0xe8] sm:$0xff]
        %v498 = vld [vmem:[%s1 + $0xf0] sm:$0xff]
        %v499 = vld [vmem:[%s1 + $0xf8] sm:$0xff]
        %500 = vmatprep.subr.mxu0 0.0
        %v501 = vand.u32 %v483, 4294901760
        %502 = vmatpush1.msra.mxu0 %v501
        %503 = vmatprep.subr.mxu0 0.0
        %v504 = vand.u32 %v482, 4294901760
        %505 = vmatpush1.msra.mxu0 %v504
        %506 = vmatprep.subr.mxu0 0.0
        %v507 = vand.u32 %v481, 4294901760
        %508 = vmatpush1.msra.mxu0 %v507
        %509 = vmatprep.subr.mxu0 0.0
        %v510 = vand.u32 %v480, 4294901760
        %511 = vmatpush1.msra.mxu0 %v510
        %512 = vmatprep.subr.mxu0 0.0
        %v513 = vand.u32 %v479, 4294901760
        %514 = vmatpush1.msra.mxu0 %v513
        %515 = vmatprep.subr.mxu0 0.0
        %v516 = vand.u32 %v478, 4294901760
        %517 = vmatpush1.msra.mxu0 %v516
        %518 = vmatprep.subr.mxu0 0.0
        %v519 = vand.u32 %v477, 4294901760
        %520 = vmatpush1.msra.mxu0 %v519
        %521 = vmatprep.subr.mxu0 0.0
        %v522 = vand.u32 %v476, 4294901760
        %523 = vmatpush1.msra.mxu0 %v522
        %524 = vmatprep.subr.mxu0 0.0
        %v525 = vand.u32 %v475, 4294901760
        %526 = vmatpush1.msra.mxu0 %v525
        %527 = vmatprep.subr.mxu0 0.0
        %v528 = vand.u32 %v474, 4294901760
        %529 = vmatpush1.msra.mxu0 %v528
        %530 = vmatprep.subr.mxu0 0.0
        %v531 = vand.u32 %v473, 4294901760
        %532 = vmatpush1.msra.mxu0 %v531
        %533 = vmatprep.subr.mxu0 0.0
        %v534 = vand.u32 %v472, 4294901760
        %535 = vmatpush1.msra.mxu0 %v534
        %536 = vmatprep.subr.mxu0 0.0
        %v537 = vand.u32 %v471, 4294901760
        %538 = vmatpush1.msra.mxu0 %v537
        %539 = vmatprep.subr.mxu0 0.0
        %v540 = vand.u32 %v470, 4294901760
        %541 = vmatpush1.msra.mxu0 %v540
        %542 = vmatprep.subr.mxu0 0.0
        %v543 = vand.u32 %v469, 4294901760
        %544 = vmatpush1.msra.mxu0 %v543
        %545 = vmatprep.subr.mxu0 0.0
        %v546 = vand.u32 %v468, 4294901760
        %547 = vmatpush1.msra.mxu0 %v546
        %548 = vmatprep.subr.mxu0 0.0
        %v549 = vand.u32 %v499, 4294901760
        %550 = vmatpush2.msra.mxu0 %v549
        %551 = vmatprep.subr.mxu0 0.0
        %v552 = vand.u32 %v498, 4294901760
        %553 = vmatpush2.msra.mxu0 %v552
        %554 = vmatprep.subr.mxu0 0.0
        %v555 = vand.u32 %v497, 4294901760
        %556 = vmatpush2.msra.mxu0 %v555
        %557 = vmatprep.subr.mxu0 0.0
        %v558 = vand.u32 %v496, 4294901760
        %559 = vmatpush2.msra.mxu0 %v558
        %560 = vmatprep.subr.mxu0 0.0
        %v561 = vand.u32 %v495, 4294901760
        %562 = vmatpush2.msra.mxu0 %v561
        %563 = vmatprep.subr.mxu0 0.0
        %v564 = vand.u32 %v494, 4294901760
        %565 = vmatpush2.msra.mxu0 %v564
        %566 = vmatprep.subr.mxu0 0.0
        %v567 = vand.u32 %v493, 4294901760
        %568 = vmatpush2.msra.mxu0 %v567
        %569 = vmatprep.subr.mxu0 0.0
        %v570 = vand.u32 %v492, 4294901760
        %571 = vmatpush2.msra.mxu0 %v570
        %572 = vmatprep.subr.mxu0 0.0
        %v573 = vand.u32 %v491, 4294901760
        %574 = vmatpush2.msra.mxu0 %v573
        %575 = vmatprep.subr.mxu0 0.0
        %v576 = vand.u32 %v490, 4294901760
        %577 = vmatpush2.msra.mxu0 %v576
        %578 = vmatprep.subr.mxu0 0.0
        %v579 = vand.u32 %v489, 4294901760
        %580 = vmatpush2.msra.mxu0 %v579
        %581 = vmatprep.subr.mxu0 0.0
        %v582 = vand.u32 %v488, 4294901760
        %583 = vmatpush2.msra.mxu0 %v582
        %584 = vmatprep.subr.mxu0 0.0
        %v585 = vand.u32 %v487, 4294901760
        %586 = vmatpush2.msra.mxu0 %v585
        %587 = vmatprep.subr.mxu0 0.0
        %v588 = vand.u32 %v486, 4294901760
        %589 = vmatpush2.msra.mxu0 %v588
        %590 = vmatprep.subr.mxu0 0.0
        %v591 = vand.u32 %v485, 4294901760
        %592 = vmatpush2.msra.mxu0 %v591
        %593 = vmatprep.subr.mxu0 0.0
        %v594 = vand.u32 %v484, 4294901760
        %595 = vmatpush2.msra.mxu0 %v594
        %v596 = vand.u32 %v405, 4294901760
        %v597 = vsub.f32 %v405, %v596
        %v598 = vand.u32 %v597, 4294901760
        %v599 = vsub.f32 %v597, %v598
        %v600 = vand.u32 %v599, 4294901760
        %601 = vmatprep.mubr.f32.mxu0 %v600
        %v602 = vand.u32 %v404, 4294901760
        %v603 = vsub.f32 %v404, %v602
        %v604 = vand.u32 %v603, 4294901760
        %v605 = vsub.f32 %v603, %v604
        %v606 = vand.u32 %v605, 4294901760
        %607 = vmatmul.mubr.f32.gmra.mxu0 %v606
        %v608 = vpop.f32.mrf.mxu0
        %v609 = vadd.f32 0.0, %v608
        %v610 = vpop.f32.mrf.mxu0
        %v611 = vand.u32 %v407, 4294901760
        %v612 = vsub.f32 %v407, %v611
        %v613 = vand.u32 %v612, 4294901760
        %v614 = vsub.f32 %v612, %v613
        %v615 = vand.u32 %v614, 4294901760
        %616 = vmatprep.mubr.f32.mxu0 %v615
        %v617 = vand.u32 %v406, 4294901760
        %v618 = vsub.f32 %v406, %v617
        %v619 = vand.u32 %v618, 4294901760
        %v620 = vsub.f32 %v618, %v619
        %v621 = vand.u32 %v620, 4294901760
        %622 = vmatmul.mubr.f32.gmra.mxu0 %v621
        %v623 = vpop.f32.mrf.mxu0
        %v624 = vadd.f32 0.0, %v623
        %v625 = vpop.f32.mrf.mxu0
        %v626 = vand.u32 %v409, 4294901760
        %v627 = vsub.f32 %v409, %v626
        %v628 = vand.u32 %v627, 4294901760
        %v629 = vsub.f32 %v627, %v628
        %v630 = vand.u32 %v629, 4294901760
        %631 = vmatprep.mubr.f32.mxu0 %v630
        %v632 = vand.u32 %v408, 4294901760
        %v633 = vsub.f32 %v408, %v632
        %v634 = vand.u32 %v633, 4294901760
        %v635 = vsub.f32 %v633, %v634
        %v636 = vand.u32 %v635, 4294901760
        %637 = vmatmul.mubr.f32.gmra.mxu0 %v636
        %v638 = vpop.f32.mrf.mxu0
        %v639 = vadd.f32 0.0, %v638
        %v640 = vpop.f32.mrf.mxu0
        %v641 = vand.u32 %v411, 4294901760
        %v642 = vsub.f32 %v411, %v641
        %v643 = vand.u32 %v642, 4294901760
        %v644 = vsub.f32 %v642, %v643
        %v645 = vand.u32 %v644, 4294901760
        %646 = vmatprep.mubr.f32.mxu0 %v645
        %v647 = vand.u32 %v410, 4294901760
        %v648 = vsub.f32 %v410, %v647
        %v649 = vand.u32 %v648, 4294901760
        %v650 = vsub.f32 %v648, %v649
        %v651 = vand.u32 %v650, 4294901760
        %652 = vmatmul.mubr.f32.gmra.mxu0 %v651
        %v653 = vpop.f32.mrf.mxu0
        %v654 = vadd.f32 0.0, %v653
        %v655 = vpop.f32.mrf.mxu0
        %v656 = vand.u32 %v413, 4294901760
        %v657 = vsub.f32 %v413, %v656
        %v658 = vand.u32 %v657, 4294901760
        %v659 = vsub.f32 %v657, %v658
        %v660 = vand.u32 %v659, 4294901760
        %661 = vmatprep.mubr.f32.mxu0 %v660
        %v662 = vand.u32 %v412, 4294901760
        %v663 = vsub.f32 %v412, %v662
        %v664 = vand.u32 %v663, 4294901760
        %v665 = vsub.f32 %v663, %v664
        %v666 = vand.u32 %v665, 4294901760
        %667 = vmatmul.mubr.f32.gmra.mxu0 %v666
        %v668 = vpop.f32.mrf.mxu0
        %v669 = vadd.f32 0.0, %v668
        %v670 = vpop.f32.mrf.mxu0
        %v671 = vand.u32 %v415, 4294901760
        %v672 = vsub.f32 %v415, %v671
        %v673 = vand.u32 %v672, 4294901760
        %v674 = vsub.f32 %v672, %v673
        %v675 = vand.u32 %v674, 4294901760
        %676 = vmatprep.mubr.f32.mxu0 %v675
        %v677 = vand.u32 %v414, 4294901760
        %v678 = vsub.f32 %v414, %v677
        %v679 = vand.u32 %v678, 4294901760
        %v680 = vsub.f32 %v678, %v679
        %v681 = vand.u32 %v680, 4294901760
        %682 = vmatmul.mubr.f32.gmra.mxu0 %v681
        %v683 = vpop.f32.mrf.mxu0
        %v684 = vadd.f32 0.0, %v683
        %v685 = vpop.f32.mrf.mxu0
        %v686 = vand.u32 %v417, 4294901760
        %v687 = vsub.f32 %v417, %v686
        %v688 = vand.u32 %v687, 4294901760
        %v689 = vsub.f32 %v687, %v688
        %v690 = vand.u32 %v689, 4294901760
        %691 = vmatprep.mubr.f32.mxu0 %v690
        %v692 = vand.u32 %v416, 4294901760
        %v693 = vsub.f32 %v416, %v692
        %v694 = vand.u32 %v693, 4294901760
        %v695 = vsub.f32 %v693, %v694
        %v696 = vand.u32 %v695, 4294901760
        %697 = vmatmul.mubr.f32.gmra.mxu0 %v696
        %v698 = vpop.f32.mrf.mxu0
        %v699 = vadd.f32 0.0, %v698
        %v700 = vpop.f32.mrf.mxu0
        %v701 = vand.u32 %v419, 4294901760
        %v702 = vsub.f32 %v419, %v701
        %v703 = vand.u32 %v702, 4294901760
        %v704 = vsub.f32 %v702, %v703
        %v705 = vand.u32 %v704, 4294901760
        %706 = vmatprep.mubr.f32.mxu0 %v705
        %v707 = vand.u32 %v418, 4294901760
        %v708 = vsub.f32 %v418, %v707
        %v709 = vand.u32 %v708, 4294901760
        %v710 = vsub.f32 %v708, %v709
        %v711 = vand.u32 %v710, 4294901760
        %712 = vmatmul.mubr.f32.gmra.mxu0 %v711
        %v713 = vpop.f32.mrf.mxu0
        %v714 = vadd.f32 0.0, %v713
        %v715 = vpop.f32.mrf.mxu0
        %v716 = vand.u32 %v421, 4294901760
        %v717 = vsub.f32 %v421, %v716
        %v718 = vand.u32 %v717, 4294901760
        %v719 = vsub.f32 %v717, %v718
        %v720 = vand.u32 %v719, 4294901760
        %721 = vmatprep.mubr.f32.mxu0 %v720
        %v722 = vand.u32 %v420, 4294901760
        %v723 = vsub.f32 %v420, %v722
        %v724 = vand.u32 %v723, 4294901760
        %v725 = vsub.f32 %v723, %v724
        %v726 = vand.u32 %v725, 4294901760
        %727 = vmatmul.mubr.f32.gmra.mxu0 %v726
        %v728 = vpop.f32.mrf.mxu0
        %v729 = vadd.f32 0.0, %v728
        %v730 = vpop.f32.mrf.mxu0
        %v731 = vand.u32 %v423, 4294901760
        %v732 = vsub.f32 %v423, %v731
        %v733 = vand.u32 %v732, 4294901760
        %v734 = vsub.f32 %v732, %v733
        %v735 = vand.u32 %v734, 4294901760
        %736 = vmatprep.mubr.f32.mxu0 %v735
        %v737 = vand.u32 %v422, 4294901760
        %v738 = vsub.f32 %v422, %v737
        %v739 = vand.u32 %v738, 4294901760
        %v740 = vsub.f32 %v738, %v739
        %v741 = vand.u32 %v740, 4294901760
        %742 = vmatmul.mubr.f32.gmra.mxu0 %v741
        %v743 = vpop.f32.mrf.mxu0
        %v744 = vadd.f32 0.0, %v743
        %v745 = vpop.f32.mrf.mxu0
        %v746 = vand.u32 %v425, 4294901760
        %v747 = vsub.f32 %v425, %v746
        %v748 = vand.u32 %v747, 4294901760
        %v749 = vsub.f32 %v747, %v748
        %v750 = vand.u32 %v749, 4294901760
        %751 = vmatprep.mubr.f32.mxu0 %v750
        %v752 = vand.u32 %v424, 4294901760
        %v753 = vsub.f32 %v424, %v752
        %v754 = vand.u32 %v753, 4294901760
        %v755 = vsub.f32 %v753, %v754
        %v756 = vand.u32 %v755, 4294901760
        %757 = vmatmul.mubr.f32.gmra.mxu0 %v756
        %v758 = vpop.f32.mrf.mxu0
        %v759 = vadd.f32 0.0, %v758
        %v760 = vpop.f32.mrf.mxu0
        %v761 = vand.u32 %v427, 4294901760
        %v762 = vsub.f32 %v427, %v761
        %v763 = vand.u32 %v762, 4294901760
        %v764 = vsub.f32 %v762, %v763
        %v765 = vand.u32 %v764, 4294901760
        %766 = vmatprep.mubr.f32.mxu0 %v765
        %v767 = vand.u32 %v426, 4294901760
        %v768 = vsub.f32 %v426, %v767
        %v769 = vand.u32 %v768, 4294901760
        %v770 = vsub.f32 %v768, %v769
        %v771 = vand.u32 %v770, 4294901760
        %772 = vmatmul.mubr.f32.gmra.mxu0 %v771
        %v773 = vpop.f32.mrf.mxu0
        %v774 = vadd.f32 0.0, %v773
        %v775 = vpop.f32.mrf.mxu0
        %v776 = vand.u32 %v429, 4294901760
        %v777 = vsub.f32 %v429, %v776
        %v778 = vand.u32 %v777, 4294901760
        %v779 = vsub.f32 %v777, %v778
        %v780 = vand.u32 %v779, 4294901760
        %781 = vmatprep.mubr.f32.mxu0 %v780
        %v782 = vand.u32 %v428, 4294901760
        %v783 = vsub.f32 %v428, %v782
        %v784 = vand.u32 %v783, 4294901760
        %v785 = vsub.f32 %v783, %v784
        %v786 = vand.u32 %v785, 4294901760
        %787 = vmatmul.mubr.f32.gmra.mxu0 %v786
        %v788 = vpop.f32.mrf.mxu0
        %v789 = vadd.f32 0.0, %v788
        %v790 = vpop.f32.mrf.mxu0
        %v791 = vand.u32 %v431, 4294901760
        %v792 = vsub.f32 %v431, %v791
        %v793 = vand.u32 %v792, 4294901760
        %v794 = vsub.f32 %v792, %v793
        %v795 = vand.u32 %v794, 4294901760
        %796 = vmatprep.mubr.f32.mxu0 %v795
        %v797 = vand.u32 %v430, 4294901760
        %v798 = vsub.f32 %v430, %v797
        %v799 = vand.u32 %v798, 4294901760
        %v800 = vsub.f32 %v798, %v799
        %v801 = vand.u32 %v800, 4294901760
        %802 = vmatmul.mubr.f32.gmra.mxu0 %v801
        %v803 = vpop.f32.mrf.mxu0
        %v804 = vadd.f32 0.0, %v803
        %v805 = vpop.f32.mrf.mxu0
        %v806 = vand.u32 %v433, 4294901760
        %v807 = vsub.f32 %v433, %v806
        %v808 = vand.u32 %v807, 4294901760
        %v809 = vsub.f32 %v807, %v808
        %v810 = vand.u32 %v809, 4294901760
        %811 = vmatprep.mubr.f32.mxu0 %v810
        %v812 = vand.u32 %v432, 4294901760
        %v813 = vsub.f32 %v432, %v812
        %v814 = vand.u32 %v813, 4294901760
        %v815 = vsub.f32 %v813, %v814
        %v816 = vand.u32 %v815, 4294901760
        %817 = vmatmul.mubr.f32.gmra.mxu0 %v816
        %v818 = vpop.f32.mrf.mxu0
        %v819 = vadd.f32 0.0, %v818
        %v820 = vpop.f32.mrf.mxu0
        %v821 = vand.u32 %v435, 4294901760
        %v822 = vsub.f32 %v435, %v821
        %v823 = vand.u32 %v822, 4294901760
        %v824 = vsub.f32 %v822, %v823
        %v825 = vand.u32 %v824, 4294901760
        %826 = vmatprep.mubr.f32.mxu0 %v825
        %v827 = vand.u32 %v434, 4294901760
        %v828 = vsub.f32 %v434, %v827
        %v829 = vand.u32 %v828, 4294901760
        %v830 = vsub.f32 %v828, %v829
        %v831 = vand.u32 %v830, 4294901760
        %832 = vmatmul.mubr.f32.gmra.mxu0 %v831
        %v833 = vpop.f32.mrf.mxu0
        %v834 = vadd.f32 0.0, %v833
        %v835 = vpop.f32.mrf.mxu0
        %v836 = vand.u32 %v437, 4294901760
        %v837 = vsub.f32 %v437, %v836
        %v838 = vand.u32 %v837, 4294901760
        %v839 = vsub.f32 %v837, %v838
        %v840 = vand.u32 %v839, 4294901760
        %841 = vmatprep.mubr.f32.mxu0 %v840
        %v842 = vand.u32 %v436, 4294901760
        %v843 = vsub.f32 %v436, %v842
        %v844 = vand.u32 %v843, 4294901760
        %v845 = vsub.f32 %v843, %v844
        %v846 = vand.u32 %v845, 4294901760
        %847 = vmatmul.mubr.f32.gmra.mxu0 %v846
        %v848 = vpop.f32.mrf.mxu0
        %v849 = vadd.f32 0.0, %v848
        %v850 = vpop.f32.mrf.mxu0
        %v851 = vand.u32 %v439, 4294901760
        %v852 = vsub.f32 %v439, %v851
        %v853 = vand.u32 %v852, 4294901760
        %v854 = vsub.f32 %v852, %v853
        %v855 = vand.u32 %v854, 4294901760
        %856 = vmatprep.mubr.f32.mxu0 %v855
        %v857 = vand.u32 %v438, 4294901760
        %v858 = vsub.f32 %v438, %v857
        %v859 = vand.u32 %v858, 4294901760
        %v860 = vsub.f32 %v858, %v859
        %v861 = vand.u32 %v860, 4294901760
        %862 = vmatmul.mubr.f32.gmra.mxu0 %v861
        %v863 = vpop.f32.mrf.mxu0
        %v864 = vadd.f32 0.0, %v863
        %v865 = vpop.f32.mrf.mxu0
        %v866 = vand.u32 %v441, 4294901760
        %v867 = vsub.f32 %v441, %v866
        %v868 = vand.u32 %v867, 4294901760
        %v869 = vsub.f32 %v867, %v868
        %v870 = vand.u32 %v869, 4294901760
        %871 = vmatprep.mubr.f32.mxu0 %v870
        %v872 = vand.u32 %v440, 4294901760
        %v873 = vsub.f32 %v440, %v872
        %v874 = vand.u32 %v873, 4294901760
        %v875 = vsub.f32 %v873, %v874
        %v876 = vand.u32 %v875, 4294901760
        %877 = vmatmul.mubr.f32.gmra.mxu0 %v876
        %v878 = vpop.f32.mrf.mxu0
        %v879 = vadd.f32 0.0, %v878
        %v880 = vpop.f32.mrf.mxu0
        %v881 = vand.u32 %v443, 4294901760
        %v882 = vsub.f32 %v443, %v881
        %v883 = vand.u32 %v882, 4294901760
        %v884 = vsub.f32 %v882, %v883
        %v885 = vand.u32 %v884, 4294901760
        %886 = vmatprep.mubr.f32.mxu0 %v885
        %v887 = vand.u32 %v442, 4294901760
        %v888 = vsub.f32 %v442, %v887
        %v889 = vand.u32 %v888, 4294901760
        %v890 = vsub.f32 %v888, %v889
        %v891 = vand.u32 %v890, 4294901760
        %892 = vmatmul.mubr.f32.gmra.mxu0 %v891
        %v893 = vpop.f32.mrf.mxu0
        %v894 = vadd.f32 0.0, %v893
        %v895 = vpop.f32.mrf.mxu0
        %v896 = vand.u32 %v445, 4294901760
        %v897 = vsub.f32 %v445, %v896
        %v898 = vand.u32 %v897, 4294901760
        %v899 = vsub.f32 %v897, %v898
        %v900 = vand.u32 %v899, 4294901760
        %901 = vmatprep.mubr.f32.mxu0 %v900
        %v902 = vand.u32 %v444, 4294901760
        %v903 = vsub.f32 %v444, %v902
        %v904 = vand.u32 %v903, 4294901760
        %v905 = vsub.f32 %v903, %v904
        %v906 = vand.u32 %v905, 4294901760
        %907 = vmatmul.mubr.f32.gmra.mxu0 %v906
        %v908 = vpop.f32.mrf.mxu0
        %v909 = vadd.f32 0.0, %v908
        %v910 = vpop.f32.mrf.mxu0
        %v911 = vand.u32 %v447, 4294901760
        %v912 = vsub.f32 %v447, %v911
        %v913 = vand.u32 %v912, 4294901760
        %v914 = vsub.f32 %v912, %v913
        %v915 = vand.u32 %v914, 4294901760
        %916 = vmatprep.mubr.f32.mxu0 %v915
        %v917 = vand.u32 %v446, 4294901760
        %v918 = vsub.f32 %v446, %v917
        %v919 = vand.u32 %v918, 4294901760
        %v920 = vsub.f32 %v918, %v919
        %v921 = vand.u32 %v920, 4294901760
        %922 = vmatmul.mubr.f32.gmra.mxu0 %v921
        %v923 = vpop.f32.mrf.mxu0
        %v924 = vadd.f32 0.0, %v923
        %v925 = vpop.f32.mrf.mxu0
        %v926 = vand.u32 %v449, 4294901760
        %v927 = vsub.f32 %v449, %v926
        %v928 = vand.u32 %v927, 4294901760
        %v929 = vsub.f32 %v927, %v928
        %v930 = vand.u32 %v929, 4294901760
        %931 = vmatprep.mubr.f32.mxu0 %v930
        %v932 = vand.u32 %v448, 4294901760
        %v933 = vsub.f32 %v448, %v932
        %v934 = vand.u32 %v933, 4294901760
        %v935 = vsub.f32 %v933, %v934
        %v936 = vand.u32 %v935, 4294901760
        %937 = vmatmul.mubr.f32.gmra.mxu0 %v936
        %v938 = vpop.f32.mrf.mxu0
        %v939 = vadd.f32 0.0, %v938
        %v940 = vpop.f32.mrf.mxu0
        %v941 = vand.u32 %v451, 4294901760
        %v942 = vsub.f32 %v451, %v941
        %v943 = vand.u32 %v942, 4294901760
        %v944 = vsub.f32 %v942, %v943
        %v945 = vand.u32 %v944, 4294901760
        %946 = vmatprep.mubr.f32.mxu0 %v945
        %v947 = vand.u32 %v450, 4294901760
        %v948 = vsub.f32 %v450, %v947
        %v949 = vand.u32 %v948, 4294901760
        %v950 = vsub.f32 %v948, %v949
        %v951 = vand.u32 %v950, 4294901760
        %952 = vmatmul.mubr.f32.gmra.mxu0 %v951
        %v953 = vpop.f32.mrf.mxu0
        %v954 = vadd.f32 0.0, %v953
        %v955 = vpop.f32.mrf.mxu0
        %v956 = vand.u32 %v453, 4294901760
        %v957 = vsub.f32 %v453, %v956
        %v958 = vand.u32 %v957, 4294901760
        %v959 = vsub.f32 %v957, %v958
        %v960 = vand.u32 %v959, 4294901760
        %961 = vmatprep.mubr.f32.mxu0 %v960
        %v962 = vand.u32 %v452, 4294901760
        %v963 = vsub.f32 %v452, %v962
        %v964 = vand.u32 %v963, 4294901760
        %v965 = vsub.f32 %v963, %v964
        %v966 = vand.u32 %v965, 4294901760
        %967 = vmatmul.mubr.f32.gmra.mxu0 %v966
        %v968 = vpop.f32.mrf.mxu0
        %v969 = vadd.f32 0.0, %v968
        %v970 = vpop.f32.mrf.mxu0
        %v971 = vand.u32 %v455, 4294901760
        %v972 = vsub.f32 %v455, %v971
        %v973 = vand.u32 %v972, 4294901760
        %v974 = vsub.f32 %v972, %v973
        %v975 = vand.u32 %v974, 4294901760
        %976 = vmatprep.mubr.f32.mxu0 %v975
        %v977 = vand.u32 %v454, 4294901760
        %v978 = vsub.f32 %v454, %v977
        %v979 = vand.u32 %v978, 4294901760
        %v980 = vsub.f32 %v978, %v979
        %v981 = vand.u32 %v980, 4294901760
        %982 = vmatmul.mubr.f32.gmra.mxu0 %v981
        %v983 = vpop.f32.mrf.mxu0
        %v984 = vadd.f32 0.0, %v983
        %v985 = vpop.f32.mrf.mxu0
        %v986 = vand.u32 %v457, 4294901760
        %v987 = vsub.f32 %v457, %v986
        %v988 = vand.u32 %v987, 4294901760
        %v989 = vsub.f32 %v987, %v988
        %v990 = vand.u32 %v989, 4294901760
        %991 = vmatprep.mubr.f32.mxu0 %v990
        %v992 = vand.u32 %v456, 4294901760
        %v993 = vsub.f32 %v456, %v992
        %v994 = vand.u32 %v993, 4294901760
        %v995 = vsub.f32 %v993, %v994
        %v996 = vand.u32 %v995, 4294901760
        %997 = vmatmul.mubr.f32.gmra.mxu0 %v996
        %v998 = vpop.f32.mrf.mxu0
        %v999 = vadd.f32 0.0, %v998
        %v1000 = vpop.f32.mrf.mxu0
        %v1001 = vand.u32 %v459, 4294901760
        %v1002 = vsub.f32 %v459, %v1001
        %v1003 = vand.u32 %v1002, 4294901760
        %v1004 = vsub.f32 %v1002, %v1003
        %v1005 = vand.u32 %v1004, 4294901760
        %1006 = vmatprep.mubr.f32.mxu0 %v1005
        %v1007 = vand.u32 %v458, 4294901760
        %v1008 = vsub.f32 %v458, %v1007
        %v1009 = vand.u32 %v1008, 4294901760
        %v1010 = vsub.f32 %v1008, %v1009
        %v1011 = vand.u32 %v1010, 4294901760
        %1012 = vmatmul.mubr.f32.gmra.mxu0 %v1011
        %v1013 = vpop.f32.mrf.mxu0
        %v1014 = vadd.f32 0.0, %v1013
        %v1015 = vpop.f32.mrf.mxu0
        %v1016 = vand.u32 %v461, 4294901760
        %v1017 = vsub.f32 %v461, %v1016
        %v1018 = vand.u32 %v1017, 4294901760
        %v1019 = vsub.f32 %v1017, %v1018
        %v1020 = vand.u32 %v1019, 4294901760
        %1021 = vmatprep.mubr.f32.mxu0 %v1020
        %v1022 = vand.u32 %v460, 4294901760
        %v1023 = vsub.f32 %v460, %v1022
        %v1024 = vand.u32 %v1023, 4294901760
        %v1025 = vsub.f32 %v1023, %v1024
        %v1026 = vand.u32 %v1025, 4294901760
        %1027 = vmatmul.mubr.f32.gmra.mxu0 %v1026
        %v1028 = vpop.f32.mrf.mxu0
        %v1029 = vadd.f32 0.0, %v1028
        %v1030 = vpop.f32.mrf.mxu0
        %v1031 = vand.u32 %v463, 4294901760
        %v1032 = vsub.f32 %v463, %v1031
        %v1033 = vand.u32 %v1032, 4294901760
        %v1034 = vsub.f32 %v1032, %v1033
        %v1035 = vand.u32 %v1034, 4294901760
        %1036 = vmatprep.mubr.f32.mxu0 %v1035
        %v1037 = vand.u32 %v462, 4294901760
        %v1038 = vsub.f32 %v462, %v1037
        %v1039 = vand.u32 %v1038, 4294901760
        %v1040 = vsub.f32 %v1038, %v1039
        %v1041 = vand.u32 %v1040, 4294901760
        %1042 = vmatmul.mubr.f32.gmra.mxu0 %v1041
        %v1043 = vpop.f32.mrf.mxu0
        %v1044 = vadd.f32 0.0, %v1043
        %v1045 = vpop.f32.mrf.mxu0
        %v1046 = vand.u32 %v465, 4294901760
        %v1047 = vsub.f32 %v465, %v1046
        %v1048 = vand.u32 %v1047, 4294901760
        %v1049 = vsub.f32 %v1047, %v1048
        %v1050 = vand.u32 %v1049, 4294901760
        %1051 = vmatprep.mubr.f32.mxu0 %v1050
        %v1052 = vand.u32 %v464, 4294901760
        %v1053 = vsub.f32 %v464, %v1052
        %v1054 = vand.u32 %v1053, 4294901760
        %v1055 = vsub.f32 %v1053, %v1054
        %v1056 = vand.u32 %v1055, 4294901760
        %1057 = vmatmul.mubr.f32.gmra.mxu0 %v1056
        %v1058 = vpop.f32.mrf.mxu0
        %v1059 = vadd.f32 0.0, %v1058
        %v1060 = vpop.f32.mrf.mxu0
        %v1061 = vand.u32 %v467, 4294901760
        %v1062 = vsub.f32 %v467, %v1061
        %v1063 = vand.u32 %v1062, 4294901760
        %v1064 = vsub.f32 %v1062, %v1063
        %v1065 = vand.u32 %v1064, 4294901760
        %1066 = vmatprep.mubr.f32.mxu0 %v1065
        %v1067 = vand.u32 %v466, 4294901760
        %v1068 = vsub.f32 %v466, %v1067
        %v1069 = vand.u32 %v1068, 4294901760
        %v1070 = vsub.f32 %v1068, %v1069
        %v1071 = vand.u32 %v1070, 4294901760
        %1072 = vmatmul.mubr.f32.gmra.mxu0 %v1071
        %v1073 = vpop.f32.mrf.mxu0
        %v1074 = vadd.f32 0.0, %v1073
        %v1075 = vpop.f32.mrf.mxu0
        %1076 = vdwg.mxu0
        %1077 = vmatprep.subr.mxu0 0.0
        %v1078 = vand.u32 %v483, 4294901760
        %v1079 = vsub.f32 %v483, %v1078
        %v1080 = vand.u32 %v1079, 4294901760
        %v1081 = vsub.f32 %v1079, %v1080
        %v1082 = vand.u32 %v1081, 4294901760
        %1083 = vmatpush1.msra.mxu0 %v1082
        %1084 = vmatprep.subr.mxu0 0.0
        %v1085 = vand.u32 %v482, 4294901760
        %v1086 = vsub.f32 %v482, %v1085
        %v1087 = vand.u32 %v1086, 4294901760
        %v1088 = vsub.f32 %v1086, %v1087
        %v1089 = vand.u32 %v1088, 4294901760
        %1090 = vmatpush1.msra.mxu0 %v1089
        %1091 = vmatprep.subr.mxu0 0.0
        %v1092 = vand.u32 %v481, 4294901760
        %v1093 = vsub.f32 %v481, %v1092
        %v1094 = vand.u32 %v1093, 4294901760
        %v1095 = vsub.f32 %v1093, %v1094
        %v1096 = vand.u32 %v1095, 4294901760
        %1097 = vmatpush1.msra.mxu0 %v1096
        %1098 = vmatprep.subr.mxu0 0.0
        %v1099 = vand.u32 %v480, 4294901760
        %v1100 = vsub.f32 %v480, %v1099
        %v1101 = vand.u32 %v1100, 4294901760
        %v1102 = vsub.f32 %v1100, %v1101
        %v1103 = vand.u32 %v1102, 4294901760
        %1104 = vmatpush1.msra.mxu0 %v1103
        %1105 = vmatprep.subr.mxu0 0.0
        %v1106 = vand.u32 %v479, 4294901760
        %v1107 = vsub.f32 %v479, %v1106
        %v1108 = vand.u32 %v1107, 4294901760
        %v1109 = vsub.f32 %v1107, %v1108
        %v1110 = vand.u32 %v1109, 4294901760
        %1111 = vmatpush1.msra.mxu0 %v1110
        %1112 = vmatprep.subr.mxu0 0.0
        %v1113 = vand.u32 %v478, 4294901760
        %v1114 = vsub.f32 %v478, %v1113
        %v1115 = vand.u32 %v1114, 4294901760
        %v1116 = vsub.f32 %v1114, %v1115
        %v1117 = vand.u32 %v1116, 4294901760
        %1118 = vmatpush1.msra.mxu0 %v1117
        %1119 = vmatprep.subr.mxu0 0.0
        %v1120 = vand.u32 %v477, 4294901760
        %v1121 = vsub.f32 %v477, %v1120
        %v1122 = vand.u32 %v1121, 4294901760
        %v1123 = vsub.f32 %v1121, %v1122
        %v1124 = vand.u32 %v1123, 4294901760
        %1125 = vmatpush1.msra.mxu0 %v1124
        %1126 = vmatprep.subr.mxu0 0.0
        %v1127 = vand.u32 %v476, 4294901760
        %v1128 = vsub.f32 %v476, %v1127
        %v1129 = vand.u32 %v1128, 4294901760
        %v1130 = vsub.f32 %v1128, %v1129
        %v1131 = vand.u32 %v1130, 4294901760
        %1132 = vmatpush1.msra.mxu0 %v1131
        %1133 = vmatprep.subr.mxu0 0.0
        %v1134 = vand.u32 %v475, 4294901760
        %v1135 = vsub.f32 %v475, %v1134
        %v1136 = vand.u32 %v1135, 4294901760
        %v1137 = vsub.f32 %v1135, %v1136
        %v1138 = vand.u32 %v1137, 4294901760
        %1139 = vmatpush1.msra.mxu0 %v1138
        %1140 = vmatprep.subr.mxu0 0.0
        %v1141 = vand.u32 %v474, 4294901760
        %v1142 = vsub.f32 %v474, %v1141
        %v1143 = vand.u32 %v1142, 4294901760
        %v1144 = vsub.f32 %v1142, %v1143
        %v1145 = vand.u32 %v1144, 4294901760
        %1146 = vmatpush1.msra.mxu0 %v1145
        %1147 = vmatprep.subr.mxu0 0.0
        %v1148 = vand.u32 %v473, 4294901760
        %v1149 = vsub.f32 %v473, %v1148
        %v1150 = vand.u32 %v1149, 4294901760
        %v1151 = vsub.f32 %v1149, %v1150
        %v1152 = vand.u32 %v1151, 4294901760
        %1153 = vmatpush1.msra.mxu0 %v1152
        %1154 = vmatprep.subr.mxu0 0.0
        %v1155 = vand.u32 %v472, 4294901760
        %v1156 = vsub.f32 %v472, %v1155
        %v1157 = vand.u32 %v1156, 4294901760
        %v1158 = vsub.f32 %v1156, %v1157
        %v1159 = vand.u32 %v1158, 4294901760
        %1160 = vmatpush1.msra.mxu0 %v1159
        %1161 = vmatprep.subr.mxu0 0.0
        %v1162 = vand.u32 %v471, 4294901760
        %v1163 = vsub.f32 %v471, %v1162
        %v1164 = vand.u32 %v1163, 4294901760
        %v1165 = vsub.f32 %v1163, %v1164
        %v1166 = vand.u32 %v1165, 4294901760
        %1167 = vmatpush1.msra.mxu0 %v1166
        %1168 = vmatprep.subr.mxu0 0.0
        %v1169 = vand.u32 %v470, 4294901760
        %v1170 = vsub.f32 %v470, %v1169
        %v1171 = vand.u32 %v1170, 4294901760
        %v1172 = vsub.f32 %v1170, %v1171
        %v1173 = vand.u32 %v1172, 4294901760
        %1174 = vmatpush1.msra.mxu0 %v1173
        %1175 = vmatprep.subr.mxu0 0.0
        %v1176 = vand.u32 %v469, 4294901760
        %v1177 = vsub.f32 %v469, %v1176
        %v1178 = vand.u32 %v1177, 4294901760
        %v1179 = vsub.f32 %v1177, %v1178
        %v1180 = vand.u32 %v1179, 4294901760
        %1181 = vmatpush1.msra.mxu0 %v1180
        %1182 = vmatprep.subr.mxu0 0.0
        %v1183 = vand.u32 %v468, 4294901760
        %v1184 = vsub.f32 %v468, %v1183
        %v1185 = vand.u32 %v1184, 4294901760
        %v1186 = vsub.f32 %v1184, %v1185
        %v1187 = vand.u32 %v1186, 4294901760
        %1188 = vmatpush1.msra.mxu0 %v1187
        %1189 = vmatprep.subr.mxu0 0.0
        %v1190 = vand.u32 %v499, 4294901760
        %v1191 = vsub.f32 %v499, %v1190
        %v1192 = vand.u32 %v1191, 4294901760
        %v1193 = vsub.f32 %v1191, %v1192
        %v1194 = vand.u32 %v1193, 4294901760
        %1195 = vmatpush2.msra.mxu0 %v1194
        %1196 = vmatprep.subr.mxu0 0.0
        %v1197 = vand.u32 %v498, 4294901760
        %v1198 = vsub.f32 %v498, %v1197
        %v1199 = vand.u32 %v1198, 4294901760
        %v1200 = vsub.f32 %v1198, %v1199
        %v1201 = vand.u32 %v1200, 4294901760
        %1202 = vmatpush2.msra.mxu0 %v1201
        %1203 = vmatprep.subr.mxu0 0.0
        %v1204 = vand.u32 %v497, 4294901760
        %v1205 = vsub.f32 %v497, %v1204
        %v1206 = vand.u32 %v1205, 4294901760
        %v1207 = vsub.f32 %v1205, %v1206
        %v1208 = vand.u32 %v1207, 4294901760
        %1209 = vmatpush2.msra.mxu0 %v1208
        %1210 = vmatprep.subr.mxu0 0.0
        %v1211 = vand.u32 %v496, 4294901760
        %v1212 = vsub.f32 %v496, %v1211
        %v1213 = vand.u32 %v1212, 4294901760
        %v1214 = vsub.f32 %v1212, %v1213
        %v1215 = vand.u32 %v1214, 4294901760
        %1216 = vmatpush2.msra.mxu0 %v1215
        %1217 = vmatprep.subr.mxu0 0.0
        %v1218 = vand.u32 %v495, 4294901760
        %v1219 = vsub.f32 %v495, %v1218
        %v1220 = vand.u32 %v1219, 4294901760
        %v1221 = vsub.f32 %v1219, %v1220
        %v1222 = vand.u32 %v1221, 4294901760
        %1223 = vmatpush2.msra.mxu0 %v1222
        %1224 = vmatprep.subr.mxu0 0.0
        %v1225 = vand.u32 %v494, 4294901760
        %v1226 = vsub.f32 %v494, %v1225
        %v1227 = vand.u32 %v1226, 4294901760
        %v1228 = vsub.f32 %v1226, %v1227
        %v1229 = vand.u32 %v1228, 4294901760
        %1230 = vmatpush2.msra.mxu0 %v1229
        %1231 = vmatprep.subr.mxu0 0.0
        %v1232 = vand.u32 %v493, 4294901760
        %v1233 = vsub.f32 %v493, %v1232
        %v1234 = vand.u32 %v1233, 4294901760
        %v1235 = vsub.f32 %v1233, %v1234
        %v1236 = vand.u32 %v1235, 4294901760
        %1237 = vmatpush2.msra.mxu0 %v1236
        %1238 = vmatprep.subr.mxu0 0.0
        %v1239 = vand.u32 %v492, 4294901760
        %v1240 = vsub.f32 %v492, %v1239
        %v1241 = vand.u32 %v1240, 4294901760
        %v1242 = vsub.f32 %v1240, %v1241
        %v1243 = vand.u32 %v1242, 4294901760
        %1244 = vmatpush2.msra.mxu0 %v1243
        %1245 = vmatprep.subr.mxu0 0.0
        %v1246 = vand.u32 %v491, 4294901760
        %v1247 = vsub.f32 %v491, %v1246
        %v1248 = vand.u32 %v1247, 4294901760
        %v1249 = vsub.f32 %v1247, %v1248
        %v1250 = vand.u32 %v1249, 4294901760
        %1251 = vmatpush2.msra.mxu0 %v1250
        %1252 = vmatprep.subr.mxu0 0.0
        %v1253 = vand.u32 %v490, 4294901760
        %v1254 = vsub.f32 %v490, %v1253
        %v1255 = vand.u32 %v1254, 4294901760
        %v1256 = vsub.f32 %v1254, %v1255
        %v1257 = vand.u32 %v1256, 4294901760
        %1258 = vmatpush2.msra.mxu0 %v1257
        %1259 = vmatprep.subr.mxu0 0.0
        %v1260 = vand.u32 %v489, 4294901760
        %v1261 = vsub.f32 %v489, %v1260
        %v1262 = vand.u32 %v1261, 4294901760
        %v1263 = vsub.f32 %v1261, %v1262
        %v1264 = vand.u32 %v1263, 4294901760
        %1265 = vmatpush2.msra.mxu0 %v1264
        %1266 = vmatprep.subr.mxu0 0.0
        %v1267 = vand.u32 %v488, 4294901760
        %v1268 = vsub.f32 %v488, %v1267
        %v1269 = vand.u32 %v1268, 4294901760
        %v1270 = vsub.f32 %v1268, %v1269
        %v1271 = vand.u32 %v1270, 4294901760
        %1272 = vmatpush2.msra.mxu0 %v1271
        %1273 = vmatprep.subr.mxu0 0.0
        %v1274 = vand.u32 %v487, 4294901760
        %v1275 = vsub.f32 %v487, %v1274
        %v1276 = vand.u32 %v1275, 4294901760
        %v1277 = vsub.f32 %v1275, %v1276
        %v1278 = vand.u32 %v1277, 4294901760
        %1279 = vmatpush2.msra.mxu0 %v1278
        %1280 = vmatprep.subr.mxu0 0.0
        %v1281 = vand.u32 %v486, 4294901760
        %v1282 = vsub.f32 %v486, %v1281
        %v1283 = vand.u32 %v1282, 4294901760
        %v1284 = vsub.f32 %v1282, %v1283
        %v1285 = vand.u32 %v1284, 4294901760
        %1286 = vmatpush2.msra.mxu0 %v1285
        %1287 = vmatprep.subr.mxu0 0.0
        %v1288 = vand.u32 %v485, 4294901760
        %v1289 = vsub.f32 %v485, %v1288
        %v1290 = vand.u32 %v1289, 4294901760
        %v1291 = vsub.f32 %v1289, %v1290
        %v1292 = vand.u32 %v1291, 4294901760
        %1293 = vmatpush2.msra.mxu0 %v1292
        %1294 = vmatprep.subr.mxu0 0.0
        %v1295 = vand.u32 %v484, 4294901760
        %v1296 = vsub.f32 %v484, %v1295
        %v1297 = vand.u32 %v1296, 4294901760
        %v1298 = vsub.f32 %v1296, %v1297
        %v1299 = vand.u32 %v1298, 4294901760
        %1300 = vmatpush2.msra.mxu0 %v1299
        %v1301 = vand.u32 %v405, 4294901760
        %1302 = vmatprep.mubr.f32.mxu0 %v1301
        %v1303 = vand.u32 %v404, 4294901760
        %1304 = vmatmul.mubr.f32.gmra.mxu0 %v1303
        %v1305 = vpop.f32.mrf.mxu0
        %v1306 = vadd.f32 %v609, %v1305
        %v1307 = vpop.f32.mrf.mxu0
        %v1308 = vand.u32 %v407, 4294901760
        %1309 = vmatprep.mubr.f32.mxu0 %v1308
        %v1310 = vand.u32 %v406, 4294901760
        %1311 = vmatmul.mubr.f32.gmra.mxu0 %v1310
        %v1312 = vpop.f32.mrf.mxu0
        %v1313 = vadd.f32 %v624, %v1312
        %v1314 = vpop.f32.mrf.mxu0
        %v1315 = vand.u32 %v409, 4294901760
        %1316 = vmatprep.mubr.f32.mxu0 %v1315
        %v1317 = vand.u32 %v408, 4294901760
        %1318 = vmatmul.mubr.f32.gmra.mxu0 %v1317
        %v1319 = vpop.f32.mrf.mxu0
        %v1320 = vadd.f32 %v639, %v1319
        %v1321 = vpop.f32.mrf.mxu0
        %v1322 = vand.u32 %v411, 4294901760
        %1323 = vmatprep.mubr.f32.mxu0 %v1322
        %v1324 = vand.u32 %v410, 4294901760
        %1325 = vmatmul.mubr.f32.gmra.mxu0 %v1324
        %v1326 = vpop.f32.mrf.mxu0
        %v1327 = vadd.f32 %v654, %v1326
        %v1328 = vpop.f32.mrf.mxu0
        %v1329 = vand.u32 %v413, 4294901760
        %1330 = vmatprep.mubr.f32.mxu0 %v1329
        %v1331 = vand.u32 %v412, 4294901760
        %1332 = vmatmul.mubr.f32.gmra.mxu0 %v1331
        %v1333 = vpop.f32.mrf.mxu0
        %v1334 = vadd.f32 %v669, %v1333
        %v1335 = vpop.f32.mrf.mxu0
        %v1336 = vand.u32 %v415, 4294901760
        %1337 = vmatprep.mubr.f32.mxu0 %v1336
        %v1338 = vand.u32 %v414, 4294901760
        %1339 = vmatmul.mubr.f32.gmra.mxu0 %v1338
        %v1340 = vpop.f32.mrf.mxu0
        %v1341 = vadd.f32 %v684, %v1340
        %v1342 = vpop.f32.mrf.mxu0
        %v1343 = vand.u32 %v417, 4294901760
        %1344 = vmatprep.mubr.f32.mxu0 %v1343
        %v1345 = vand.u32 %v416, 4294901760
        %1346 = vmatmul.mubr.f32.gmra.mxu0 %v1345
        %v1347 = vpop.f32.mrf.mxu0
        %v1348 = vadd.f32 %v699, %v1347
        %v1349 = vpop.f32.mrf.mxu0
        %v1350 = vand.u32 %v419, 4294901760
        %1351 = vmatprep.mubr.f32.mxu0 %v1350
        %v1352 = vand.u32 %v418, 4294901760
        %1353 = vmatmul.mubr.f32.gmra.mxu0 %v1352
        %v1354 = vpop.f32.mrf.mxu0
        %v1355 = vadd.f32 %v714, %v1354
        %v1356 = vpop.f32.mrf.mxu0
        %v1357 = vand.u32 %v421, 4294901760
        %1358 = vmatprep.mubr.f32.mxu0 %v1357
        %v1359 = vand.u32 %v420, 4294901760
        %1360 = vmatmul.mubr.f32.gmra.mxu0 %v1359
        %v1361 = vpop.f32.mrf.mxu0
        %v1362 = vadd.f32 %v729, %v1361
        %v1363 = vpop.f32.mrf.mxu0
        %v1364 = vand.u32 %v423, 4294901760
        %1365 = vmatprep.mubr.f32.mxu0 %v1364
        %v1366 = vand.u32 %v422, 4294901760
        %1367 = vmatmul.mubr.f32.gmra.mxu0 %v1366
        %v1368 = vpop.f32.mrf.mxu0
        %v1369 = vadd.f32 %v744, %v1368
        %v1370 = vpop.f32.mrf.mxu0
        %v1371 = vand.u32 %v425, 4294901760
        %1372 = vmatprep.mubr.f32.mxu0 %v1371
        %v1373 = vand.u32 %v424, 4294901760
        %1374 = vmatmul.mubr.f32.gmra.mxu0 %v1373
        %v1375 = vpop.f32.mrf.mxu0
        %v1376 = vadd.f32 %v759, %v1375
        %v1377 = vpop.f32.mrf.mxu0
        %v1378 = vand.u32 %v427, 4294901760
        %1379 = vmatprep.mubr.f32.mxu0 %v1378
        %v1380 = vand.u32 %v426, 4294901760
        %1381 = vmatmul.mubr.f32.gmra.mxu0 %v1380
        %v1382 = vpop.f32.mrf.mxu0
        %v1383 = vadd.f32 %v774, %v1382
        %v1384 = vpop.f32.mrf.mxu0
        %v1385 = vand.u32 %v429, 4294901760
        %1386 = vmatprep.mubr.f32.mxu0 %v1385
        %v1387 = vand.u32 %v428, 4294901760
        %1388 = vmatmul.mubr.f32.gmra.mxu0 %v1387
        %v1389 = vpop.f32.mrf.mxu0
        %v1390 = vadd.f32 %v789, %v1389
        %v1391 = vpop.f32.mrf.mxu0
        %v1392 = vand.u32 %v431, 4294901760
        %1393 = vmatprep.mubr.f32.mxu0 %v1392
        %v1394 = vand.u32 %v430, 4294901760
        %1395 = vmatmul.mubr.f32.gmra.mxu0 %v1394
        %v1396 = vpop.f32.mrf.mxu0
        %v1397 = vadd.f32 %v804, %v1396
        %v1398 = vpop.f32.mrf.mxu0
        %v1399 = vand.u32 %v433, 4294901760
        %1400 = vmatprep.mubr.f32.mxu0 %v1399
        %v1401 = vand.u32 %v432, 4294901760
        %1402 = vmatmul.mubr.f32.gmra.mxu0 %v1401
        %v1403 = vpop.f32.mrf.mxu0
        %v1404 = vadd.f32 %v819, %v1403
        %v1405 = vpop.f32.mrf.mxu0
        %v1406 = vand.u32 %v435, 4294901760
        %1407 = vmatprep.mubr.f32.mxu0 %v1406
        %v1408 = vand.u32 %v434, 4294901760
        %1409 = vmatmul.mubr.f32.gmra.mxu0 %v1408
        %v1410 = vpop.f32.mrf.mxu0
        %v1411 = vadd.f32 %v834, %v1410
        %v1412 = vpop.f32.mrf.mxu0
        %v1413 = vand.u32 %v437, 4294901760
        %1414 = vmatprep.mubr.f32.mxu0 %v1413
        %v1415 = vand.u32 %v436, 4294901760
        %1416 = vmatmul.mubr.f32.gmra.mxu0 %v1415
        %v1417 = vpop.f32.mrf.mxu0
        %v1418 = vadd.f32 %v849, %v1417
        %v1419 = vpop.f32.mrf.mxu0
        %v1420 = vand.u32 %v439, 4294901760
        %1421 = vmatprep.mubr.f32.mxu0 %v1420
        %v1422 = vand.u32 %v438, 4294901760
        %1423 = vmatmul.mubr.f32.gmra.mxu0 %v1422
        %v1424 = vpop.f32.mrf.mxu0
        %v1425 = vadd.f32 %v864, %v1424
        %v1426 = vpop.f32.mrf.mxu0
        %v1427 = vand.u32 %v441, 4294901760
        %1428 = vmatprep.mubr.f32.mxu0 %v1427
        %v1429 = vand.u32 %v440, 4294901760
        %1430 = vmatmul.mubr.f32.gmra.mxu0 %v1429
        %v1431 = vpop.f32.mrf.mxu0
        %v1432 = vadd.f32 %v879, %v1431
        %v1433 = vpop.f32.mrf.mxu0
        %v1434 = vand.u32 %v443, 4294901760
        %1435 = vmatprep.mubr.f32.mxu0 %v1434
        %v1436 = vand.u32 %v442, 4294901760
        %1437 = vmatmul.mubr.f32.gmra.mxu0 %v1436
        %v1438 = vpop.f32.mrf.mxu0
        %v1439 = vadd.f32 %v894, %v1438
        %v1440 = vpop.f32.mrf.mxu0
        %v1441 = vand.u32 %v445, 4294901760
        %1442 = vmatprep.mubr.f32.mxu0 %v1441
        %v1443 = vand.u32 %v444, 4294901760
        %1444 = vmatmul.mubr.f32.gmra.mxu0 %v1443
        %v1445 = vpop.f32.mrf.mxu0
        %v1446 = vadd.f32 %v909, %v1445
        %v1447 = vpop.f32.mrf.mxu0
        %v1448 = vand.u32 %v447, 4294901760
        %1449 = vmatprep.mubr.f32.mxu0 %v1448
        %v1450 = vand.u32 %v446, 4294901760
        %1451 = vmatmul.mubr.f32.gmra.mxu0 %v1450
        %v1452 = vpop.f32.mrf.mxu0
        %v1453 = vadd.f32 %v924, %v1452
        %v1454 = vpop.f32.mrf.mxu0
        %v1455 = vand.u32 %v449, 4294901760
        %1456 = vmatprep.mubr.f32.mxu0 %v1455
        %v1457 = vand.u32 %v448, 4294901760
        %1458 = vmatmul.mubr.f32.gmra.mxu0 %v1457
        %v1459 = vpop.f32.mrf.mxu0
        %v1460 = vadd.f32 %v939, %v1459
        %v1461 = vpop.f32.mrf.mxu0
        %v1462 = vand.u32 %v451, 4294901760
        %1463 = vmatprep.mubr.f32.mxu0 %v1462
        %v1464 = vand.u32 %v450, 4294901760
        %1465 = vmatmul.mubr.f32.gmra.mxu0 %v1464
        %v1466 = vpop.f32.mrf.mxu0
        %v1467 = vadd.f32 %v954, %v1466
        %v1468 = vpop.f32.mrf.mxu0
        %v1469 = vand.u32 %v453, 4294901760
        %1470 = vmatprep.mubr.f32.mxu0 %v1469
        %v1471 = vand.u32 %v452, 4294901760
        %1472 = vmatmul.mubr.f32.gmra.mxu0 %v1471
        %v1473 = vpop.f32.mrf.mxu0
        %v1474 = vadd.f32 %v969, %v1473
        %v1475 = vpop.f32.mrf.mxu0
        %v1476 = vand.u32 %v455, 4294901760
        %1477 = vmatprep.mubr.f32.mxu0 %v1476
        %v1478 = vand.u32 %v454, 4294901760
        %1479 = vmatmul.mubr.f32.gmra.mxu0 %v1478
        %v1480 = vpop.f32.mrf.mxu0
        %v1481 = vadd.f32 %v984, %v1480
        %v1482 = vpop.f32.mrf.mxu0
        %v1483 = vand.u32 %v457, 4294901760
        %1484 = vmatprep.mubr.f32.mxu0 %v1483
        %v1485 = vand.u32 %v456, 4294901760
        %1486 = vmatmul.mubr.f32.gmra.mxu0 %v1485
        %v1487 = vpop.f32.mrf.mxu0
        %v1488 = vadd.f32 %v999, %v1487
        %v1489 = vpop.f32.mrf.mxu0
        %v1490 = vand.u32 %v459, 4294901760
        %1491 = vmatprep.mubr.f32.mxu0 %v1490
        %v1492 = vand.u32 %v458, 4294901760
        %1493 = vmatmul.mubr.f32.gmra.mxu0 %v1492
        %v1494 = vpop.f32.mrf.mxu0
        %v1495 = vadd.f32 %v1014, %v1494
        %v1496 = vpop.f32.mrf.mxu0
        %v1497 = vand.u32 %v461, 4294901760
        %1498 = vmatprep.mubr.f32.mxu0 %v1497
        %v1499 = vand.u32 %v460, 4294901760
        %1500 = vmatmul.mubr.f32.gmra.mxu0 %v1499
        %v1501 = vpop.f32.mrf.mxu0
        %v1502 = vadd.f32 %v1029, %v1501
        %v1503 = vpop.f32.mrf.mxu0
        %v1504 = vand.u32 %v463, 4294901760
        %1505 = vmatprep.mubr.f32.mxu0 %v1504
        %v1506 = vand.u32 %v462, 4294901760
        %1507 = vmatmul.mubr.f32.gmra.mxu0 %v1506
        %v1508 = vpop.f32.mrf.mxu0
        %v1509 = vadd.f32 %v1044, %v1508
        %v1510 = vpop.f32.mrf.mxu0
        %v1511 = vand.u32 %v465, 4294901760
        %1512 = vmatprep.mubr.f32.mxu0 %v1511
        %v1513 = vand.u32 %v464, 4294901760
        %1514 = vmatmul.mubr.f32.gmra.mxu0 %v1513
        %v1515 = vpop.f32.mrf.mxu0
        %v1516 = vadd.f32 %v1059, %v1515
        %v1517 = vpop.f32.mrf.mxu0
        %v1518 = vand.u32 %v467, 4294901760
        %1519 = vmatprep.mubr.f32.mxu0 %v1518
        %v1520 = vand.u32 %v466, 4294901760
        %1521 = vmatmul.mubr.f32.gmra.mxu0 %v1520
        %v1522 = vpop.f32.mrf.mxu0
        %v1523 = vadd.f32 %v1074, %v1522
        %v1524 = vpop.f32.mrf.mxu0
        %1525 = vdwg.mxu0
        %1526 = vmatprep.subr.mxu0 0.0
        %v1527 = vand.u32 %v483, 4294901760
        %v1528 = vsub.f32 %v483, %v1527
        %1529 = vmatpush1.msra.mxu0 %v1528
        %1530 = vmatprep.subr.mxu0 0.0
        %v1531 = vand.u32 %v482, 4294901760
        %v1532 = vsub.f32 %v482, %v1531
        %1533 = vmatpush1.msra.mxu0 %v1532
        %1534 = vmatprep.subr.mxu0 0.0
        %v1535 = vand.u32 %v481, 4294901760
        %v1536 = vsub.f32 %v481, %v1535
        %1537 = vmatpush1.msra.mxu0 %v1536
        %1538 = vmatprep.subr.mxu0 0.0
        %v1539 = vand.u32 %v480, 4294901760
        %v1540 = vsub.f32 %v480, %v1539
        %1541 = vmatpush1.msra.mxu0 %v1540
        %1542 = vmatprep.subr.mxu0 0.0
        %v1543 = vand.u32 %v479, 4294901760
        %v1544 = vsub.f32 %v479, %v1543
        %1545 = vmatpush1.msra.mxu0 %v1544
        %1546 = vmatprep.subr.mxu0 0.0
        %v1547 = vand.u32 %v478, 4294901760
        %v1548 = vsub.f32 %v478, %v1547
        %1549 = vmatpush1.msra.mxu0 %v1548
        %1550 = vmatprep.subr.mxu0 0.0
        %v1551 = vand.u32 %v477, 4294901760
        %v1552 = vsub.f32 %v477, %v1551
        %1553 = vmatpush1.msra.mxu0 %v1552
        %1554 = vmatprep.subr.mxu0 0.0
        %v1555 = vand.u32 %v476, 4294901760
        %v1556 = vsub.f32 %v476, %v1555
        %1557 = vmatpush1.msra.mxu0 %v1556
        %1558 = vmatprep.subr.mxu0 0.0
        %v1559 = vand.u32 %v475, 4294901760
        %v1560 = vsub.f32 %v475, %v1559
        %1561 = vmatpush1.msra.mxu0 %v1560
        %1562 = vmatprep.subr.mxu0 0.0
        %v1563 = vand.u32 %v474, 4294901760
        %v1564 = vsub.f32 %v474, %v1563
        %1565 = vmatpush1.msra.mxu0 %v1564
        %1566 = vmatprep.subr.mxu0 0.0
        %v1567 = vand.u32 %v473, 4294901760
        %v1568 = vsub.f32 %v473, %v1567
        %1569 = vmatpush1.msra.mxu0 %v1568
        %1570 = vmatprep.subr.mxu0 0.0
        %v1571 = vand.u32 %v472, 4294901760
        %v1572 = vsub.f32 %v472, %v1571
        %1573 = vmatpush1.msra.mxu0 %v1572
        %1574 = vmatprep.subr.mxu0 0.0
        %v1575 = vand.u32 %v471, 4294901760
        %v1576 = vsub.f32 %v471, %v1575
        %1577 = vmatpush1.msra.mxu0 %v1576
        %1578 = vmatprep.subr.mxu0 0.0
        %v1579 = vand.u32 %v470, 4294901760
        %v1580 = vsub.f32 %v470, %v1579
        %1581 = vmatpush1.msra.mxu0 %v1580
        %1582 = vmatprep.subr.mxu0 0.0
        %v1583 = vand.u32 %v469, 4294901760
        %v1584 = vsub.f32 %v469, %v1583
        %1585 = vmatpush1.msra.mxu0 %v1584
        %1586 = vmatprep.subr.mxu0 0.0
        %v1587 = vand.u32 %v468, 4294901760
        %v1588 = vsub.f32 %v468, %v1587
        %1589 = vmatpush1.msra.mxu0 %v1588
        %1590 = vmatprep.subr.mxu0 0.0
        %v1591 = vand.u32 %v499, 4294901760
        %v1592 = vsub.f32 %v499, %v1591
        %1593 = vmatpush2.msra.mxu0 %v1592
        %1594 = vmatprep.subr.mxu0 0.0
        %v1595 = vand.u32 %v498, 4294901760
        %v1596 = vsub.f32 %v498, %v1595
        %1597 = vmatpush2.msra.mxu0 %v1596
        %1598 = vmatprep.subr.mxu0 0.0
        %v1599 = vand.u32 %v497, 4294901760
        %v1600 = vsub.f32 %v497, %v1599
        %1601 = vmatpush2.msra.mxu0 %v1600
        %1602 = vmatprep.subr.mxu0 0.0
        %v1603 = vand.u32 %v496, 4294901760
        %v1604 = vsub.f32 %v496, %v1603
        %1605 = vmatpush2.msra.mxu0 %v1604
        %1606 = vmatprep.subr.mxu0 0.0
        %v1607 = vand.u32 %v495, 4294901760
        %v1608 = vsub.f32 %v495, %v1607
        %1609 = vmatpush2.msra.mxu0 %v1608
        %1610 = vmatprep.subr.mxu0 0.0
        %v1611 = vand.u32 %v494, 4294901760
        %v1612 = vsub.f32 %v494, %v1611
        %1613 = vmatpush2.msra.mxu0 %v1612
        %1614 = vmatprep.subr.mxu0 0.0
        %v1615 = vand.u32 %v493, 4294901760
        %v1616 = vsub.f32 %v493, %v1615
        %1617 = vmatpush2.msra.mxu0 %v1616
        %1618 = vmatprep.subr.mxu0 0.0
        %v1619 = vand.u32 %v492, 4294901760
        %v1620 = vsub.f32 %v492, %v1619
        %1621 = vmatpush2.msra.mxu0 %v1620
        %1622 = vmatprep.subr.mxu0 0.0
        %v1623 = vand.u32 %v491, 4294901760
        %v1624 = vsub.f32 %v491, %v1623
        %1625 = vmatpush2.msra.mxu0 %v1624
        %1626 = vmatprep.subr.mxu0 0.0
        %v1627 = vand.u32 %v490, 4294901760
        %v1628 = vsub.f32 %v490, %v1627
        %1629 = vmatpush2.msra.mxu0 %v1628
        %1630 = vmatprep.subr.mxu0 0.0
        %v1631 = vand.u32 %v489, 4294901760
        %v1632 = vsub.f32 %v489, %v1631
        %1633 = vmatpush2.msra.mxu0 %v1632
        %1634 = vmatprep.subr.mxu0 0.0
        %v1635 = vand.u32 %v488, 4294901760
        %v1636 = vsub.f32 %v488, %v1635
        %1637 = vmatpush2.msra.mxu0 %v1636
        %1638 = vmatprep.subr.mxu0 0.0
        %v1639 = vand.u32 %v487, 4294901760
        %v1640 = vsub.f32 %v487, %v1639
        %1641 = vmatpush2.msra.mxu0 %v1640
        %1642 = vmatprep.subr.mxu0 0.0
        %v1643 = vand.u32 %v486, 4294901760
        %v1644 = vsub.f32 %v486, %v1643
        %1645 = vmatpush2.msra.mxu0 %v1644
        %1646 = vmatprep.subr.mxu0 0.0
        %v1647 = vand.u32 %v485, 4294901760
        %v1648 = vsub.f32 %v485, %v1647
        %1649 = vmatpush2.msra.mxu0 %v1648
        %1650 = vmatprep.subr.mxu0 0.0
        %v1651 = vand.u32 %v484, 4294901760
        %v1652 = vsub.f32 %v484, %v1651
        %1653 = vmatpush2.msra.mxu0 %v1652
        %v1654 = vand.u32 %v405, 4294901760
        %v1655 = vsub.f32 %v405, %v1654
        %1656 = vmatprep.mubr.f32.mxu0 %v1655
        %v1657 = vand.u32 %v404, 4294901760
        %v1658 = vsub.f32 %v404, %v1657
        %1659 = vmatmul.mubr.f32.gmra.mxu0 %v1658
        %v1660 = vpop.f32.mrf.mxu0
        %v1661 = vadd.f32 %v1306, %v1660
        %v1662 = vpop.f32.mrf.mxu0
        %v1663 = vand.u32 %v407, 4294901760
        %v1664 = vsub.f32 %v407, %v1663
        %1665 = vmatprep.mubr.f32.mxu0 %v1664
        %v1666 = vand.u32 %v406, 4294901760
        %v1667 = vsub.f32 %v406, %v1666
        %1668 = vmatmul.mubr.f32.gmra.mxu0 %v1667
        %v1669 = vpop.f32.mrf.mxu0
        %v1670 = vadd.f32 %v1313, %v1669
        %v1671 = vpop.f32.mrf.mxu0
        %v1672 = vand.u32 %v409, 4294901760
        %v1673 = vsub.f32 %v409, %v1672
        %1674 = vmatprep.mubr.f32.mxu0 %v1673
        %v1675 = vand.u32 %v408, 4294901760
        %v1676 = vsub.f32 %v408, %v1675
        %1677 = vmatmul.mubr.f32.gmra.mxu0 %v1676
        %v1678 = vpop.f32.mrf.mxu0
        %v1679 = vadd.f32 %v1320, %v1678
        %v1680 = vpop.f32.mrf.mxu0
        %v1681 = vand.u32 %v411, 4294901760
        %v1682 = vsub.f32 %v411, %v1681
        %1683 = vmatprep.mubr.f32.mxu0 %v1682
        %v1684 = vand.u32 %v410, 4294901760
        %v1685 = vsub.f32 %v410, %v1684
        %1686 = vmatmul.mubr.f32.gmra.mxu0 %v1685
        %v1687 = vpop.f32.mrf.mxu0
        %v1688 = vadd.f32 %v1327, %v1687
        %v1689 = vpop.f32.mrf.mxu0
        %v1690 = vand.u32 %v413, 4294901760
        %v1691 = vsub.f32 %v413, %v1690
        %1692 = vmatprep.mubr.f32.mxu0 %v1691
        %v1693 = vand.u32 %v412, 4294901760
        %v1694 = vsub.f32 %v412, %v1693
        %1695 = vmatmul.mubr.f32.gmra.mxu0 %v1694
        %v1696 = vpop.f32.mrf.mxu0
        %v1697 = vadd.f32 %v1334, %v1696
        %v1698 = vpop.f32.mrf.mxu0
        %v1699 = vand.u32 %v415, 4294901760
        %v1700 = vsub.f32 %v415, %v1699
        %1701 = vmatprep.mubr.f32.mxu0 %v1700
        %v1702 = vand.u32 %v414, 4294901760
        %v1703 = vsub.f32 %v414, %v1702
        %1704 = vmatmul.mubr.f32.gmra.mxu0 %v1703
        %v1705 = vpop.f32.mrf.mxu0
        %v1706 = vadd.f32 %v1341, %v1705
        %v1707 = vpop.f32.mrf.mxu0
        %v1708 = vand.u32 %v417, 4294901760
        %v1709 = vsub.f32 %v417, %v1708
        %1710 = vmatprep.mubr.f32.mxu0 %v1709
        %v1711 = vand.u32 %v416, 4294901760
        %v1712 = vsub.f32 %v416, %v1711
        %1713 = vmatmul.mubr.f32.gmra.mxu0 %v1712
        %v1714 = vpop.f32.mrf.mxu0
        %v1715 = vadd.f32 %v1348, %v1714
        %v1716 = vpop.f32.mrf.mxu0
        %v1717 = vand.u32 %v419, 4294901760
        %v1718 = vsub.f32 %v419, %v1717
        %1719 = vmatprep.mubr.f32.mxu0 %v1718
        %v1720 = vand.u32 %v418, 4294901760
        %v1721 = vsub.f32 %v418, %v1720
        %1722 = vmatmul.mubr.f32.gmra.mxu0 %v1721
        %v1723 = vpop.f32.mrf.mxu0
        %v1724 = vadd.f32 %v1355, %v1723
        %v1725 = vpop.f32.mrf.mxu0
        %v1726 = vand.u32 %v421, 4294901760
        %v1727 = vsub.f32 %v421, %v1726
        %1728 = vmatprep.mubr.f32.mxu0 %v1727
        %v1729 = vand.u32 %v420, 4294901760
        %v1730 = vsub.f32 %v420, %v1729
        %1731 = vmatmul.mubr.f32.gmra.mxu0 %v1730
        %v1732 = vpop.f32.mrf.mxu0
        %v1733 = vadd.f32 %v1362, %v1732
        %v1734 = vpop.f32.mrf.mxu0
        %v1735 = vand.u32 %v423, 4294901760
        %v1736 = vsub.f32 %v423, %v1735
        %1737 = vmatprep.mubr.f32.mxu0 %v1736
        %v1738 = vand.u32 %v422, 4294901760
        %v1739 = vsub.f32 %v422, %v1738
        %1740 = vmatmul.mubr.f32.gmra.mxu0 %v1739
        %v1741 = vpop.f32.mrf.mxu0
        %v1742 = vadd.f32 %v1369, %v1741
        %v1743 = vpop.f32.mrf.mxu0
        %v1744 = vand.u32 %v425, 4294901760
        %v1745 = vsub.f32 %v425, %v1744
        %1746 = vmatprep.mubr.f32.mxu0 %v1745
        %v1747 = vand.u32 %v424, 4294901760
        %v1748 = vsub.f32 %v424, %v1747
        %1749 = vmatmul.mubr.f32.gmra.mxu0 %v1748
        %v1750 = vpop.f32.mrf.mxu0
        %v1751 = vadd.f32 %v1376, %v1750
        %v1752 = vpop.f32.mrf.mxu0
        %v1753 = vand.u32 %v427, 4294901760
        %v1754 = vsub.f32 %v427, %v1753
        %1755 = vmatprep.mubr.f32.mxu0 %v1754
        %v1756 = vand.u32 %v426, 4294901760
        %v1757 = vsub.f32 %v426, %v1756
        %1758 = vmatmul.mubr.f32.gmra.mxu0 %v1757
        %v1759 = vpop.f32.mrf.mxu0
        %v1760 = vadd.f32 %v1383, %v1759
        %v1761 = vpop.f32.mrf.mxu0
        %v1762 = vand.u32 %v429, 4294901760
        %v1763 = vsub.f32 %v429, %v1762
        %1764 = vmatprep.mubr.f32.mxu0 %v1763
        %v1765 = vand.u32 %v428, 4294901760
        %v1766 = vsub.f32 %v428, %v1765
        %1767 = vmatmul.mubr.f32.gmra.mxu0 %v1766
        %v1768 = vpop.f32.mrf.mxu0
        %v1769 = vadd.f32 %v1390, %v1768
        %v1770 = vpop.f32.mrf.mxu0
        %v1771 = vand.u32 %v431, 4294901760
        %v1772 = vsub.f32 %v431, %v1771
        %1773 = vmatprep.mubr.f32.mxu0 %v1772
        %v1774 = vand.u32 %v430, 4294901760
        %v1775 = vsub.f32 %v430, %v1774
        %1776 = vmatmul.mubr.f32.gmra.mxu0 %v1775
        %v1777 = vpop.f32.mrf.mxu0
        %v1778 = vadd.f32 %v1397, %v1777
        %v1779 = vpop.f32.mrf.mxu0
        %v1780 = vand.u32 %v433, 4294901760
        %v1781 = vsub.f32 %v433, %v1780
        %1782 = vmatprep.mubr.f32.mxu0 %v1781
        %v1783 = vand.u32 %v432, 4294901760
        %v1784 = vsub.f32 %v432, %v1783
        %1785 = vmatmul.mubr.f32.gmra.mxu0 %v1784
        %v1786 = vpop.f32.mrf.mxu0
        %v1787 = vadd.f32 %v1404, %v1786
        %v1788 = vpop.f32.mrf.mxu0
        %v1789 = vand.u32 %v435, 4294901760
        %v1790 = vsub.f32 %v435, %v1789
        %1791 = vmatprep.mubr.f32.mxu0 %v1790
        %v1792 = vand.u32 %v434, 4294901760
        %v1793 = vsub.f32 %v434, %v1792
        %1794 = vmatmul.mubr.f32.gmra.mxu0 %v1793
        %v1795 = vpop.f32.mrf.mxu0
        %v1796 = vadd.f32 %v1411, %v1795
        %v1797 = vpop.f32.mrf.mxu0
        %v1798 = vand.u32 %v437, 4294901760
        %v1799 = vsub.f32 %v437, %v1798
        %1800 = vmatprep.mubr.f32.mxu0 %v1799
        %v1801 = vand.u32 %v436, 4294901760
        %v1802 = vsub.f32 %v436, %v1801
        %1803 = vmatmul.mubr.f32.gmra.mxu0 %v1802
        %v1804 = vpop.f32.mrf.mxu0
        %v1805 = vadd.f32 %v1418, %v1804
        %v1806 = vpop.f32.mrf.mxu0
        %v1807 = vand.u32 %v439, 4294901760
        %v1808 = vsub.f32 %v439, %v1807
        %1809 = vmatprep.mubr.f32.mxu0 %v1808
        %v1810 = vand.u32 %v438, 4294901760
        %v1811 = vsub.f32 %v438, %v1810
        %1812 = vmatmul.mubr.f32.gmra.mxu0 %v1811
        %v1813 = vpop.f32.mrf.mxu0
        %v1814 = vadd.f32 %v1425, %v1813
        %v1815 = vpop.f32.mrf.mxu0
        %v1816 = vand.u32 %v441, 4294901760
        %v1817 = vsub.f32 %v441, %v1816
        %1818 = vmatprep.mubr.f32.mxu0 %v1817
        %v1819 = vand.u32 %v440, 4294901760
        %v1820 = vsub.f32 %v440, %v1819
        %1821 = vmatmul.mubr.f32.gmra.mxu0 %v1820
        %v1822 = vpop.f32.mrf.mxu0
        %v1823 = vadd.f32 %v1432, %v1822
        %v1824 = vpop.f32.mrf.mxu0
        %v1825 = vand.u32 %v443, 4294901760
        %v1826 = vsub.f32 %v443, %v1825
        %1827 = vmatprep.mubr.f32.mxu0 %v1826
        %v1828 = vand.u32 %v442, 4294901760
        %v1829 = vsub.f32 %v442, %v1828
        %1830 = vmatmul.mubr.f32.gmra.mxu0 %v1829
        %v1831 = vpop.f32.mrf.mxu0
        %v1832 = vadd.f32 %v1439, %v1831
        %v1833 = vpop.f32.mrf.mxu0
        %v1834 = vand.u32 %v445, 4294901760
        %v1835 = vsub.f32 %v445, %v1834
        %1836 = vmatprep.mubr.f32.mxu0 %v1835
        %v1837 = vand.u32 %v444, 4294901760
        %v1838 = vsub.f32 %v444, %v1837
        %1839 = vmatmul.mubr.f32.gmra.mxu0 %v1838
        %v1840 = vpop.f32.mrf.mxu0
        %v1841 = vadd.f32 %v1446, %v1840
        %v1842 = vpop.f32.mrf.mxu0
        %v1843 = vand.u32 %v447, 4294901760
        %v1844 = vsub.f32 %v447, %v1843
        %1845 = vmatprep.mubr.f32.mxu0 %v1844
        %v1846 = vand.u32 %v446, 4294901760
        %v1847 = vsub.f32 %v446, %v1846
        %1848 = vmatmul.mubr.f32.gmra.mxu0 %v1847
        %v1849 = vpop.f32.mrf.mxu0
        %v1850 = vadd.f32 %v1453, %v1849
        %v1851 = vpop.f32.mrf.mxu0
        %v1852 = vand.u32 %v449, 4294901760
        %v1853 = vsub.f32 %v449, %v1852
        %1854 = vmatprep.mubr.f32.mxu0 %v1853
        %v1855 = vand.u32 %v448, 4294901760
        %v1856 = vsub.f32 %v448, %v1855
        %1857 = vmatmul.mubr.f32.gmra.mxu0 %v1856
        %v1858 = vpop.f32.mrf.mxu0
        %v1859 = vadd.f32 %v1460, %v1858
        %v1860 = vpop.f32.mrf.mxu0
        %v1861 = vand.u32 %v451, 4294901760
        %v1862 = vsub.f32 %v451, %v1861
        %1863 = vmatprep.mubr.f32.mxu0 %v1862
        %v1864 = vand.u32 %v450, 4294901760
        %v1865 = vsub.f32 %v450, %v1864
        %1866 = vmatmul.mubr.f32.gmra.mxu0 %v1865
        %v1867 = vpop.f32.mrf.mxu0
        %v1868 = vadd.f32 %v1467, %v1867
        %v1869 = vpop.f32.mrf.mxu0
        %v1870 = vand.u32 %v453, 4294901760
        %v1871 = vsub.f32 %v453, %v1870
        %1872 = vmatprep.mubr.f32.mxu0 %v1871
        %v1873 = vand.u32 %v452, 4294901760
        %v1874 = vsub.f32 %v452, %v1873
        %1875 = vmatmul.mubr.f32.gmra.mxu0 %v1874
        %v1876 = vpop.f32.mrf.mxu0
        %v1877 = vadd.f32 %v1474, %v1876
        %v1878 = vpop.f32.mrf.mxu0
        %v1879 = vand.u32 %v455, 4294901760
        %v1880 = vsub.f32 %v455, %v1879
        %1881 = vmatprep.mubr.f32.mxu0 %v1880
        %v1882 = vand.u32 %v454, 4294901760
        %v1883 = vsub.f32 %v454, %v1882
        %1884 = vmatmul.mubr.f32.gmra.mxu0 %v1883
        %v1885 = vpop.f32.mrf.mxu0
        %v1886 = vadd.f32 %v1481, %v1885
        %v1887 = vpop.f32.mrf.mxu0
        %v1888 = vand.u32 %v457, 4294901760
        %v1889 = vsub.f32 %v457, %v1888
        %1890 = vmatprep.mubr.f32.mxu0 %v1889
        %v1891 = vand.u32 %v456, 4294901760
        %v1892 = vsub.f32 %v456, %v1891
        %1893 = vmatmul.mubr.f32.gmra.mxu0 %v1892
        %v1894 = vpop.f32.mrf.mxu0
        %v1895 = vadd.f32 %v1488, %v1894
        %v1896 = vpop.f32.mrf.mxu0
        %v1897 = vand.u32 %v459, 4294901760
        %v1898 = vsub.f32 %v459, %v1897
        %1899 = vmatprep.mubr.f32.mxu0 %v1898
        %v1900 = vand.u32 %v458, 4294901760
        %v1901 = vsub.f32 %v458, %v1900
        %1902 = vmatmul.mubr.f32.gmra.mxu0 %v1901
        %v1903 = vpop.f32.mrf.mxu0
        %v1904 = vadd.f32 %v1495, %v1903
        %v1905 = vpop.f32.mrf.mxu0
        %v1906 = vand.u32 %v461, 4294901760
        %v1907 = vsub.f32 %v461, %v1906
        %1908 = vmatprep.mubr.f32.mxu0 %v1907
        %v1909 = vand.u32 %v460, 4294901760
        %v1910 = vsub.f32 %v460, %v1909
        %1911 = vmatmul.mubr.f32.gmra.mxu0 %v1910
        %v1912 = vpop.f32.mrf.mxu0
        %v1913 = vadd.f32 %v1502, %v1912
        %v1914 = vpop.f32.mrf.mxu0
        %v1915 = vand.u32 %v463, 4294901760
        %v1916 = vsub.f32 %v463, %v1915
        %1917 = vmatprep.mubr.f32.mxu0 %v1916
        %v1918 = vand.u32 %v462, 4294901760
        %v1919 = vsub.f32 %v462, %v1918
        %1920 = vmatmul.mubr.f32.gmra.mxu0 %v1919
        %v1921 = vpop.f32.mrf.mxu0
        %v1922 = vadd.f32 %v1509, %v1921
        %v1923 = vpop.f32.mrf.mxu0
        %v1924 = vand.u32 %v465, 4294901760
        %v1925 = vsub.f32 %v465, %v1924
        %1926 = vmatprep.mubr.f32.mxu0 %v1925
        %v1927 = vand.u32 %v464, 4294901760
        %v1928 = vsub.f32 %v464, %v1927
        %1929 = vmatmul.mubr.f32.gmra.mxu0 %v1928
        %v1930 = vpop.f32.mrf.mxu0
        %v1931 = vadd.f32 %v1516, %v1930
        %v1932 = vpop.f32.mrf.mxu0
        %v1933 = vand.u32 %v467, 4294901760
        %v1934 = vsub.f32 %v467, %v1933
        %1935 = vmatprep.mubr.f32.mxu0 %v1934
        %v1936 = vand.u32 %v466, 4294901760
        %v1937 = vsub.f32 %v466, %v1936
        %1938 = vmatmul.mubr.f32.gmra.mxu0 %v1937
        %v1939 = vpop.f32.mrf.mxu0
        %v1940 = vadd.f32 %v1523, %v1939
        %v1941 = vpop.f32.mrf.mxu0
        %1942 = vdwg.mxu0
        %1943 = vmatprep.subr.mxu0 0.0
        %v1944 = vand.u32 %v483, 4294901760
        %1945 = vmatpush1.msra.mxu0 %v1944
        %1946 = vmatprep.subr.mxu0 0.0
        %v1947 = vand.u32 %v482, 4294901760
        %1948 = vmatpush1.msra.mxu0 %v1947
        %1949 = vmatprep.subr.mxu0 0.0
        %v1950 = vand.u32 %v481, 4294901760
        %1951 = vmatpush1.msra.mxu0 %v1950
        %1952 = vmatprep.subr.mxu0 0.0
        %v1953 = vand.u32 %v480, 4294901760
        %1954 = vmatpush1.msra.mxu0 %v1953
        %1955 = vmatprep.subr.mxu0 0.0
        %v1956 = vand.u32 %v479, 4294901760
        %1957 = vmatpush1.msra.mxu0 %v1956
        %1958 = vmatprep.subr.mxu0 0.0
        %v1959 = vand.u32 %v478, 4294901760
        %1960 = vmatpush1.msra.mxu0 %v1959
        %1961 = vmatprep.subr.mxu0 0.0
        %v1962 = vand.u32 %v477, 4294901760
        %1963 = vmatpush1.msra.mxu0 %v1962
        %1964 = vmatprep.subr.mxu0 0.0
        %v1965 = vand.u32 %v476, 4294901760
        %1966 = vmatpush1.msra.mxu0 %v1965
        %1967 = vmatprep.subr.mxu0 0.0
        %v1968 = vand.u32 %v475, 4294901760
        %1969 = vmatpush1.msra.mxu0 %v1968
        %1970 = vmatprep.subr.mxu0 0.0
        %v1971 = vand.u32 %v474, 4294901760
        %1972 = vmatpush1.msra.mxu0 %v1971
        %1973 = vmatprep.subr.mxu0 0.0
        %v1974 = vand.u32 %v473, 4294901760
        %1975 = vmatpush1.msra.mxu0 %v1974
        %1976 = vmatprep.subr.mxu0 0.0
        %v1977 = vand.u32 %v472, 4294901760
        %1978 = vmatpush1.msra.mxu0 %v1977
        %1979 = vmatprep.subr.mxu0 0.0
        %v1980 = vand.u32 %v471, 4294901760
        %1981 = vmatpush1.msra.mxu0 %v1980
        %1982 = vmatprep.subr.mxu0 0.0
        %v1983 = vand.u32 %v470, 4294901760
        %1984 = vmatpush1.msra.mxu0 %v1983
        %1985 = vmatprep.subr.mxu0 0.0
        %v1986 = vand.u32 %v469, 4294901760
        %1987 = vmatpush1.msra.mxu0 %v1986
        %1988 = vmatprep.subr.mxu0 0.0
        %v1989 = vand.u32 %v468, 4294901760
        %1990 = vmatpush1.msra.mxu0 %v1989
        %1991 = vmatprep.subr.mxu0 0.0
        %v1992 = vand.u32 %v499, 4294901760
        %1993 = vmatpush2.msra.mxu0 %v1992
        %1994 = vmatprep.subr.mxu0 0.0
        %v1995 = vand.u32 %v498, 4294901760
        %1996 = vmatpush2.msra.mxu0 %v1995
        %1997 = vmatprep.subr.mxu0 0.0
        %v1998 = vand.u32 %v497, 4294901760
        %1999 = vmatpush2.msra.mxu0 %v1998
        %2000 = vmatprep.subr.mxu0 0.0
        %v2001 = vand.u32 %v496, 4294901760
        %2002 = vmatpush2.msra.mxu0 %v2001
        %2003 = vmatprep.subr.mxu0 0.0
        %v2004 = vand.u32 %v495, 4294901760
        %2005 = vmatpush2.msra.mxu0 %v2004
        %2006 = vmatprep.subr.mxu0 0.0
        %v2007 = vand.u32 %v494, 4294901760
        %2008 = vmatpush2.msra.mxu0 %v2007
        %2009 = vmatprep.subr.mxu0 0.0
        %v2010 = vand.u32 %v493, 4294901760
        %2011 = vmatpush2.msra.mxu0 %v2010
        %2012 = vmatprep.subr.mxu0 0.0
        %v2013 = vand.u32 %v492, 4294901760
        %2014 = vmatpush2.msra.mxu0 %v2013
        %2015 = vmatprep.subr.mxu0 0.0
        %v2016 = vand.u32 %v491, 4294901760
        %2017 = vmatpush2.msra.mxu0 %v2016
        %2018 = vmatprep.subr.mxu0 0.0
        %v2019 = vand.u32 %v490, 4294901760
        %2020 = vmatpush2.msra.mxu0 %v2019
        %2021 = vmatprep.subr.mxu0 0.0
        %v2022 = vand.u32 %v489, 4294901760
        %2023 = vmatpush2.msra.mxu0 %v2022
        %2024 = vmatprep.subr.mxu0 0.0
        %v2025 = vand.u32 %v488, 4294901760
        %2026 = vmatpush2.msra.mxu0 %v2025
        %2027 = vmatprep.subr.mxu0 0.0
        %v2028 = vand.u32 %v487, 4294901760
        %2029 = vmatpush2.msra.mxu0 %v2028
        %2030 = vmatprep.subr.mxu0 0.0
        %v2031 = vand.u32 %v486, 4294901760
        %2032 = vmatpush2.msra.mxu0 %v2031
        %2033 = vmatprep.subr.mxu0 0.0
        %v2034 = vand.u32 %v485, 4294901760
        %2035 = vmatpush2.msra.mxu0 %v2034
        %2036 = vmatprep.subr.mxu0 0.0
        %v2037 = vand.u32 %v484, 4294901760
        %2038 = vmatpush2.msra.mxu0 %v2037
        %v2039 = vand.u32 %v405, 4294901760
        %v2040 = vsub.f32 %v405, %v2039
        %v2041 = vand.u32 %v2040, 4294901760
        %2042 = vmatprep.mubr.f32.mxu0 %v2041
        %v2043 = vand.u32 %v404, 4294901760
        %v2044 = vsub.f32 %v404, %v2043
        %v2045 = vand.u32 %v2044, 4294901760
        %2046 = vmatmul.mubr.f32.gmra.mxu0 %v2045
        %v2047 = vpop.f32.mrf.mxu0
        %v2048 = vadd.f32 %v1661, %v2047
        %v2049 = vpop.f32.mrf.mxu0
        %v2050 = vand.u32 %v407, 4294901760
        %v2051 = vsub.f32 %v407, %v2050
        %v2052 = vand.u32 %v2051, 4294901760
        %2053 = vmatprep.mubr.f32.mxu0 %v2052
        %v2054 = vand.u32 %v406, 4294901760
        %v2055 = vsub.f32 %v406, %v2054
        %v2056 = vand.u32 %v2055, 4294901760
        %2057 = vmatmul.mubr.f32.gmra.mxu0 %v2056
        %v2058 = vpop.f32.mrf.mxu0
        %v2059 = vadd.f32 %v1670, %v2058
        %v2060 = vpop.f32.mrf.mxu0
        %v2061 = vand.u32 %v409, 4294901760
        %v2062 = vsub.f32 %v409, %v2061
        %v2063 = vand.u32 %v2062, 4294901760
        %2064 = vmatprep.mubr.f32.mxu0 %v2063
        %v2065 = vand.u32 %v408, 4294901760
        %v2066 = vsub.f32 %v408, %v2065
        %v2067 = vand.u32 %v2066, 4294901760
        %2068 = vmatmul.mubr.f32.gmra.mxu0 %v2067
        %v2069 = vpop.f32.mrf.mxu0
        %v2070 = vadd.f32 %v1679, %v2069
        %v2071 = vpop.f32.mrf.mxu0
        %v2072 = vand.u32 %v411, 4294901760
        %v2073 = vsub.f32 %v411, %v2072
        %v2074 = vand.u32 %v2073, 4294901760
        %2075 = vmatprep.mubr.f32.mxu0 %v2074
        %v2076 = vand.u32 %v410, 4294901760
        %v2077 = vsub.f32 %v410, %v2076
        %v2078 = vand.u32 %v2077, 4294901760
        %2079 = vmatmul.mubr.f32.gmra.mxu0 %v2078
        %v2080 = vpop.f32.mrf.mxu0
        %v2081 = vadd.f32 %v1688, %v2080
        %v2082 = vpop.f32.mrf.mxu0
        %v2083 = vand.u32 %v413, 4294901760
        %v2084 = vsub.f32 %v413, %v2083
        %v2085 = vand.u32 %v2084, 4294901760
        %2086 = vmatprep.mubr.f32.mxu0 %v2085
        %v2087 = vand.u32 %v412, 4294901760
        %v2088 = vsub.f32 %v412, %v2087
        %v2089 = vand.u32 %v2088, 4294901760
        %2090 = vmatmul.mubr.f32.gmra.mxu0 %v2089
        %v2091 = vpop.f32.mrf.mxu0
        %v2092 = vadd.f32 %v1697, %v2091
        %v2093 = vpop.f32.mrf.mxu0
        %v2094 = vand.u32 %v415, 4294901760
        %v2095 = vsub.f32 %v415, %v2094
        %v2096 = vand.u32 %v2095, 4294901760
        %2097 = vmatprep.mubr.f32.mxu0 %v2096
        %v2098 = vand.u32 %v414, 4294901760
        %v2099 = vsub.f32 %v414, %v2098
        %v2100 = vand.u32 %v2099, 4294901760
        %2101 = vmatmul.mubr.f32.gmra.mxu0 %v2100
        %v2102 = vpop.f32.mrf.mxu0
        %v2103 = vadd.f32 %v1706, %v2102
        %v2104 = vpop.f32.mrf.mxu0
        %v2105 = vand.u32 %v417, 4294901760
        %v2106 = vsub.f32 %v417, %v2105
        %v2107 = vand.u32 %v2106, 4294901760
        %2108 = vmatprep.mubr.f32.mxu0 %v2107
        %v2109 = vand.u32 %v416, 4294901760
        %v2110 = vsub.f32 %v416, %v2109
        %v2111 = vand.u32 %v2110, 4294901760
        %2112 = vmatmul.mubr.f32.gmra.mxu0 %v2111
        %v2113 = vpop.f32.mrf.mxu0
        %v2114 = vadd.f32 %v1715, %v2113
        %v2115 = vpop.f32.mrf.mxu0
        %v2116 = vand.u32 %v419, 4294901760
        %v2117 = vsub.f32 %v419, %v2116
        %v2118 = vand.u32 %v2117, 4294901760
        %2119 = vmatprep.mubr.f32.mxu0 %v2118
        %v2120 = vand.u32 %v418, 4294901760
        %v2121 = vsub.f32 %v418, %v2120
        %v2122 = vand.u32 %v2121, 4294901760
        %2123 = vmatmul.mubr.f32.gmra.mxu0 %v2122
        %v2124 = vpop.f32.mrf.mxu0
        %v2125 = vadd.f32 %v1724, %v2124
        %v2126 = vpop.f32.mrf.mxu0
        %v2127 = vand.u32 %v421, 4294901760
        %v2128 = vsub.f32 %v421, %v2127
        %v2129 = vand.u32 %v2128, 4294901760
        %2130 = vmatprep.mubr.f32.mxu0 %v2129
        %v2131 = vand.u32 %v420, 4294901760
        %v2132 = vsub.f32 %v420, %v2131
        %v2133 = vand.u32 %v2132, 4294901760
        %2134 = vmatmul.mubr.f32.gmra.mxu0 %v2133
        %v2135 = vpop.f32.mrf.mxu0
        %v2136 = vadd.f32 %v1733, %v2135
        %v2137 = vpop.f32.mrf.mxu0
        %v2138 = vand.u32 %v423, 4294901760
        %v2139 = vsub.f32 %v423, %v2138
        %v2140 = vand.u32 %v2139, 4294901760
        %2141 = vmatprep.mubr.f32.mxu0 %v2140
        %v2142 = vand.u32 %v422, 4294901760
        %v2143 = vsub.f32 %v422, %v2142
        %v2144 = vand.u32 %v2143, 4294901760
        %2145 = vmatmul.mubr.f32.gmra.mxu0 %v2144
        %v2146 = vpop.f32.mrf.mxu0
        %v2147 = vadd.f32 %v1742, %v2146
        %v2148 = vpop.f32.mrf.mxu0
        %v2149 = vand.u32 %v425, 4294901760
        %v2150 = vsub.f32 %v425, %v2149
        %v2151 = vand.u32 %v2150, 4294901760
        %2152 = vmatprep.mubr.f32.mxu0 %v2151
        %v2153 = vand.u32 %v424, 4294901760
        %v2154 = vsub.f32 %v424, %v2153
        %v2155 = vand.u32 %v2154, 4294901760
        %2156 = vmatmul.mubr.f32.gmra.mxu0 %v2155
        %v2157 = vpop.f32.mrf.mxu0
        %v2158 = vadd.f32 %v1751, %v2157
        %v2159 = vpop.f32.mrf.mxu0
        %v2160 = vand.u32 %v427, 4294901760
        %v2161 = vsub.f32 %v427, %v2160
        %v2162 = vand.u32 %v2161, 4294901760
        %2163 = vmatprep.mubr.f32.mxu0 %v2162
        %v2164 = vand.u32 %v426, 4294901760
        %v2165 = vsub.f32 %v426, %v2164
        %v2166 = vand.u32 %v2165, 4294901760
        %2167 = vmatmul.mubr.f32.gmra.mxu0 %v2166
        %v2168 = vpop.f32.mrf.mxu0
        %v2169 = vadd.f32 %v1760, %v2168
        %v2170 = vpop.f32.mrf.mxu0
        %v2171 = vand.u32 %v429, 4294901760
        %v2172 = vsub.f32 %v429, %v2171
        %v2173 = vand.u32 %v2172, 4294901760
        %2174 = vmatprep.mubr.f32.mxu0 %v2173
        %v2175 = vand.u32 %v428, 4294901760
        %v2176 = vsub.f32 %v428, %v2175
        %v2177 = vand.u32 %v2176, 4294901760
        %2178 = vmatmul.mubr.f32.gmra.mxu0 %v2177
        %v2179 = vpop.f32.mrf.mxu0
        %v2180 = vadd.f32 %v1769, %v2179
        %v2181 = vpop.f32.mrf.mxu0
        %v2182 = vand.u32 %v431, 4294901760
        %v2183 = vsub.f32 %v431, %v2182
        %v2184 = vand.u32 %v2183, 4294901760
        %2185 = vmatprep.mubr.f32.mxu0 %v2184
        %v2186 = vand.u32 %v430, 4294901760
        %v2187 = vsub.f32 %v430, %v2186
        %v2188 = vand.u32 %v2187, 4294901760
        %2189 = vmatmul.mubr.f32.gmra.mxu0 %v2188
        %v2190 = vpop.f32.mrf.mxu0
        %v2191 = vadd.f32 %v1778, %v2190
        %v2192 = vpop.f32.mrf.mxu0
        %v2193 = vand.u32 %v433, 4294901760
        %v2194 = vsub.f32 %v433, %v2193
        %v2195 = vand.u32 %v2194, 4294901760
        %2196 = vmatprep.mubr.f32.mxu0 %v2195
        %v2197 = vand.u32 %v432, 4294901760
        %v2198 = vsub.f32 %v432, %v2197
        %v2199 = vand.u32 %v2198, 4294901760
        %2200 = vmatmul.mubr.f32.gmra.mxu0 %v2199
        %v2201 = vpop.f32.mrf.mxu0
        %v2202 = vadd.f32 %v1787, %v2201
        %v2203 = vpop.f32.mrf.mxu0
        %v2204 = vand.u32 %v435, 4294901760
        %v2205 = vsub.f32 %v435, %v2204
        %v2206 = vand.u32 %v2205, 4294901760
        %2207 = vmatprep.mubr.f32.mxu0 %v2206
        %v2208 = vand.u32 %v434, 4294901760
        %v2209 = vsub.f32 %v434, %v2208
        %v2210 = vand.u32 %v2209, 4294901760
        %2211 = vmatmul.mubr.f32.gmra.mxu0 %v2210
        %v2212 = vpop.f32.mrf.mxu0
        %v2213 = vadd.f32 %v1796, %v2212
        %v2214 = vpop.f32.mrf.mxu0
        %v2215 = vand.u32 %v437, 4294901760
        %v2216 = vsub.f32 %v437, %v2215
        %v2217 = vand.u32 %v2216, 4294901760
        %2218 = vmatprep.mubr.f32.mxu0 %v2217
        %v2219 = vand.u32 %v436, 4294901760
        %v2220 = vsub.f32 %v436, %v2219
        %v2221 = vand.u32 %v2220, 4294901760
        %2222 = vmatmul.mubr.f32.gmra.mxu0 %v2221
        %v2223 = vpop.f32.mrf.mxu0
        %v2224 = vadd.f32 %v1805, %v2223
        %v2225 = vpop.f32.mrf.mxu0
        %v2226 = vand.u32 %v439, 4294901760
        %v2227 = vsub.f32 %v439, %v2226
        %v2228 = vand.u32 %v2227, 4294901760
        %2229 = vmatprep.mubr.f32.mxu0 %v2228
        %v2230 = vand.u32 %v438, 4294901760
        %v2231 = vsub.f32 %v438, %v2230
        %v2232 = vand.u32 %v2231, 4294901760
        %2233 = vmatmul.mubr.f32.gmra.mxu0 %v2232
        %v2234 = vpop.f32.mrf.mxu0
        %v2235 = vadd.f32 %v1814, %v2234
        %v2236 = vpop.f32.mrf.mxu0
        %v2237 = vand.u32 %v441, 4294901760
        %v2238 = vsub.f32 %v441, %v2237
        %v2239 = vand.u32 %v2238, 4294901760
        %2240 = vmatprep.mubr.f32.mxu0 %v2239
        %v2241 = vand.u32 %v440, 4294901760
        %v2242 = vsub.f32 %v440, %v2241
        %v2243 = vand.u32 %v2242, 4294901760
        %2244 = vmatmul.mubr.f32.gmra.mxu0 %v2243
        %v2245 = vpop.f32.mrf.mxu0
        %v2246 = vadd.f32 %v1823, %v2245
        %v2247 = vpop.f32.mrf.mxu0
        %v2248 = vand.u32 %v443, 4294901760
        %v2249 = vsub.f32 %v443, %v2248
        %v2250 = vand.u32 %v2249, 4294901760
        %2251 = vmatprep.mubr.f32.mxu0 %v2250
        %v2252 = vand.u32 %v442, 4294901760
        %v2253 = vsub.f32 %v442, %v2252
        %v2254 = vand.u32 %v2253, 4294901760
        %2255 = vmatmul.mubr.f32.gmra.mxu0 %v2254
        %v2256 = vpop.f32.mrf.mxu0
        %v2257 = vadd.f32 %v1832, %v2256
        %v2258 = vpop.f32.mrf.mxu0
        %v2259 = vand.u32 %v445, 4294901760
        %v2260 = vsub.f32 %v445, %v2259
        %v2261 = vand.u32 %v2260, 4294901760
        %2262 = vmatprep.mubr.f32.mxu0 %v2261
        %v2263 = vand.u32 %v444, 4294901760
        %v2264 = vsub.f32 %v444, %v2263
        %v2265 = vand.u32 %v2264, 4294901760
        %2266 = vmatmul.mubr.f32.gmra.mxu0 %v2265
        %v2267 = vpop.f32.mrf.mxu0
        %v2268 = vadd.f32 %v1841, %v2267
        %v2269 = vpop.f32.mrf.mxu0
        %v2270 = vand.u32 %v447, 4294901760
        %v2271 = vsub.f32 %v447, %v2270
        %v2272 = vand.u32 %v2271, 4294901760
        %2273 = vmatprep.mubr.f32.mxu0 %v2272
        %v2274 = vand.u32 %v446, 4294901760
        %v2275 = vsub.f32 %v446, %v2274
        %v2276 = vand.u32 %v2275, 4294901760
        %2277 = vmatmul.mubr.f32.gmra.mxu0 %v2276
        %v2278 = vpop.f32.mrf.mxu0
        %v2279 = vadd.f32 %v1850, %v2278
        %v2280 = vpop.f32.mrf.mxu0
        %v2281 = vand.u32 %v449, 4294901760
        %v2282 = vsub.f32 %v449, %v2281
        %v2283 = vand.u32 %v2282, 4294901760
        %2284 = vmatprep.mubr.f32.mxu0 %v2283
        %v2285 = vand.u32 %v448, 4294901760
        %v2286 = vsub.f32 %v448, %v2285
        %v2287 = vand.u32 %v2286, 4294901760
        %2288 = vmatmul.mubr.f32.gmra.mxu0 %v2287
        %v2289 = vpop.f32.mrf.mxu0
        %v2290 = vadd.f32 %v1859, %v2289
        %v2291 = vpop.f32.mrf.mxu0
        %v2292 = vand.u32 %v451, 4294901760
        %v2293 = vsub.f32 %v451, %v2292
        %v2294 = vand.u32 %v2293, 4294901760
        %2295 = vmatprep.mubr.f32.mxu0 %v2294
        %v2296 = vand.u32 %v450, 4294901760
        %v2297 = vsub.f32 %v450, %v2296
        %v2298 = vand.u32 %v2297, 4294901760
        %2299 = vmatmul.mubr.f32.gmra.mxu0 %v2298
        %v2300 = vpop.f32.mrf.mxu0
        %v2301 = vadd.f32 %v1868, %v2300
        %v2302 = vpop.f32.mrf.mxu0
        %v2303 = vand.u32 %v453, 4294901760
        %v2304 = vsub.f32 %v453, %v2303
        %v2305 = vand.u32 %v2304, 4294901760
        %2306 = vmatprep.mubr.f32.mxu0 %v2305
        %v2307 = vand.u32 %v452, 4294901760
        %v2308 = vsub.f32 %v452, %v2307
        %v2309 = vand.u32 %v2308, 4294901760
        %2310 = vmatmul.mubr.f32.gmra.mxu0 %v2309
        %v2311 = vpop.f32.mrf.mxu0
        %v2312 = vadd.f32 %v1877, %v2311
        %v2313 = vpop.f32.mrf.mxu0
        %v2314 = vand.u32 %v455, 4294901760
        %v2315 = vsub.f32 %v455, %v2314
        %v2316 = vand.u32 %v2315, 4294901760
        %2317 = vmatprep.mubr.f32.mxu0 %v2316
        %v2318 = vand.u32 %v454, 4294901760
        %v2319 = vsub.f32 %v454, %v2318
        %v2320 = vand.u32 %v2319, 4294901760
        %2321 = vmatmul.mubr.f32.gmra.mxu0 %v2320
        %v2322 = vpop.f32.mrf.mxu0
        %v2323 = vadd.f32 %v1886, %v2322
        %v2324 = vpop.f32.mrf.mxu0
        %v2325 = vand.u32 %v457, 4294901760
        %v2326 = vsub.f32 %v457, %v2325
        %v2327 = vand.u32 %v2326, 4294901760
        %2328 = vmatprep.mubr.f32.mxu0 %v2327
        %v2329 = vand.u32 %v456, 4294901760
        %v2330 = vsub.f32 %v456, %v2329
        %v2331 = vand.u32 %v2330, 4294901760
        %2332 = vmatmul.mubr.f32.gmra.mxu0 %v2331
        %v2333 = vpop.f32.mrf.mxu0
        %v2334 = vadd.f32 %v1895, %v2333
        %v2335 = vpop.f32.mrf.mxu0
        %v2336 = vand.u32 %v459, 4294901760
        %v2337 = vsub.f32 %v459, %v2336
        %v2338 = vand.u32 %v2337, 4294901760
        %2339 = vmatprep.mubr.f32.mxu0 %v2338
        %v2340 = vand.u32 %v458, 4294901760
        %v2341 = vsub.f32 %v458, %v2340
        %v2342 = vand.u32 %v2341, 4294901760
        %2343 = vmatmul.mubr.f32.gmra.mxu0 %v2342
        %v2344 = vpop.f32.mrf.mxu0
        %v2345 = vadd.f32 %v1904, %v2344
        %v2346 = vpop.f32.mrf.mxu0
        %v2347 = vand.u32 %v461, 4294901760
        %v2348 = vsub.f32 %v461, %v2347
        %v2349 = vand.u32 %v2348, 4294901760
        %2350 = vmatprep.mubr.f32.mxu0 %v2349
        %v2351 = vand.u32 %v460, 4294901760
        %v2352 = vsub.f32 %v460, %v2351
        %v2353 = vand.u32 %v2352, 4294901760
        %2354 = vmatmul.mubr.f32.gmra.mxu0 %v2353
        %v2355 = vpop.f32.mrf.mxu0
        %v2356 = vadd.f32 %v1913, %v2355
        %v2357 = vpop.f32.mrf.mxu0
        %v2358 = vand.u32 %v463, 4294901760
        %v2359 = vsub.f32 %v463, %v2358
        %v2360 = vand.u32 %v2359, 4294901760
        %2361 = vmatprep.mubr.f32.mxu0 %v2360
        %v2362 = vand.u32 %v462, 4294901760
        %v2363 = vsub.f32 %v462, %v2362
        %v2364 = vand.u32 %v2363, 4294901760
        %2365 = vmatmul.mubr.f32.gmra.mxu0 %v2364
        %v2366 = vpop.f32.mrf.mxu0
        %v2367 = vadd.f32 %v1922, %v2366
        %v2368 = vpop.f32.mrf.mxu0
        %v2369 = vand.u32 %v465, 4294901760
        %v2370 = vsub.f32 %v465, %v2369
        %v2371 = vand.u32 %v2370, 4294901760
        %2372 = vmatprep.mubr.f32.mxu0 %v2371
        %v2373 = vand.u32 %v464, 4294901760
        %v2374 = vsub.f32 %v464, %v2373
        %v2375 = vand.u32 %v2374, 4294901760
        %2376 = vmatmul.mubr.f32.gmra.mxu0 %v2375
        %v2377 = vpop.f32.mrf.mxu0
        %v2378 = vadd.f32 %v1931, %v2377
        %v2379 = vpop.f32.mrf.mxu0
        %v2380 = vand.u32 %v467, 4294901760
        %v2381 = vsub.f32 %v467, %v2380
        %v2382 = vand.u32 %v2381, 4294901760
        %2383 = vmatprep.mubr.f32.mxu0 %v2382
        %v2384 = vand.u32 %v466, 4294901760
        %v2385 = vsub.f32 %v466, %v2384
        %v2386 = vand.u32 %v2385, 4294901760
        %2387 = vmatmul.mubr.f32.gmra.mxu0 %v2386
        %v2388 = vpop.f32.mrf.mxu0
        %v2389 = vadd.f32 %v1940, %v2388
        %v2390 = vpop.f32.mrf.mxu0
        %2391 = vdwg.mxu0
        %2392 = vmatprep.subr.mxu0 0.0
        %v2393 = vand.u32 %v483, 4294901760
        %v2394 = vsub.f32 %v483, %v2393
        %v2395 = vand.u32 %v2394, 4294901760
        %2396 = vmatpush1.msra.mxu0 %v2395
        %2397 = vmatprep.subr.mxu0 0.0
        %v2398 = vand.u32 %v482, 4294901760
        %v2399 = vsub.f32 %v482, %v2398
        %v2400 = vand.u32 %v2399, 4294901760
        %2401 = vmatpush1.msra.mxu0 %v2400
        %2402 = vmatprep.subr.mxu0 0.0
        %v2403 = vand.u32 %v481, 4294901760
        %v2404 = vsub.f32 %v481, %v2403
        %v2405 = vand.u32 %v2404, 4294901760
        %2406 = vmatpush1.msra.mxu0 %v2405
        %2407 = vmatprep.subr.mxu0 0.0
        %v2408 = vand.u32 %v480, 4294901760
        %v2409 = vsub.f32 %v480, %v2408
        %v2410 = vand.u32 %v2409, 4294901760
        %2411 = vmatpush1.msra.mxu0 %v2410
        %2412 = vmatprep.subr.mxu0 0.0
        %v2413 = vand.u32 %v479, 4294901760
        %v2414 = vsub.f32 %v479, %v2413
        %v2415 = vand.u32 %v2414, 4294901760
        %2416 = vmatpush1.msra.mxu0 %v2415
        %2417 = vmatprep.subr.mxu0 0.0
        %v2418 = vand.u32 %v478, 4294901760
        %v2419 = vsub.f32 %v478, %v2418
        %v2420 = vand.u32 %v2419, 4294901760
        %2421 = vmatpush1.msra.mxu0 %v2420
        %2422 = vmatprep.subr.mxu0 0.0
        %v2423 = vand.u32 %v477, 4294901760
        %v2424 = vsub.f32 %v477, %v2423
        %v2425 = vand.u32 %v2424, 4294901760
        %2426 = vmatpush1.msra.mxu0 %v2425
        %2427 = vmatprep.subr.mxu0 0.0
        %v2428 = vand.u32 %v476, 4294901760
        %v2429 = vsub.f32 %v476, %v2428
        %v2430 = vand.u32 %v2429, 4294901760
        %2431 = vmatpush1.msra.mxu0 %v2430
        %2432 = vmatprep.subr.mxu0 0.0
        %v2433 = vand.u32 %v475, 4294901760
        %v2434 = vsub.f32 %v475, %v2433
        %v2435 = vand.u32 %v2434, 4294901760
        %2436 = vmatpush1.msra.mxu0 %v2435
        %2437 = vmatprep.subr.mxu0 0.0
        %v2438 = vand.u32 %v474, 4294901760
        %v2439 = vsub.f32 %v474, %v2438
        %v2440 = vand.u32 %v2439, 4294901760
        %2441 = vmatpush1.msra.mxu0 %v2440
        %2442 = vmatprep.subr.mxu0 0.0
        %v2443 = vand.u32 %v473, 4294901760
        %v2444 = vsub.f32 %v473, %v2443
        %v2445 = vand.u32 %v2444, 4294901760
        %2446 = vmatpush1.msra.mxu0 %v2445
        %2447 = vmatprep.subr.mxu0 0.0
        %v2448 = vand.u32 %v472, 4294901760
        %v2449 = vsub.f32 %v472, %v2448
        %v2450 = vand.u32 %v2449, 4294901760
        %2451 = vmatpush1.msra.mxu0 %v2450
        %2452 = vmatprep.subr.mxu0 0.0
        %v2453 = vand.u32 %v471, 4294901760
        %v2454 = vsub.f32 %v471, %v2453
        %v2455 = vand.u32 %v2454, 4294901760
        %2456 = vmatpush1.msra.mxu0 %v2455
        %2457 = vmatprep.subr.mxu0 0.0
        %v2458 = vand.u32 %v470, 4294901760
        %v2459 = vsub.f32 %v470, %v2458
        %v2460 = vand.u32 %v2459, 4294901760
        %2461 = vmatpush1.msra.mxu0 %v2460
        %2462 = vmatprep.subr.mxu0 0.0
        %v2463 = vand.u32 %v469, 4294901760
        %v2464 = vsub.f32 %v469, %v2463
        %v2465 = vand.u32 %v2464, 4294901760
        %2466 = vmatpush1.msra.mxu0 %v2465
        %2467 = vmatprep.subr.mxu0 0.0
        %v2468 = vand.u32 %v468, 4294901760
        %v2469 = vsub.f32 %v468, %v2468
        %v2470 = vand.u32 %v2469, 4294901760
        %2471 = vmatpush1.msra.mxu0 %v2470
        %2472 = vmatprep.subr.mxu0 0.0
        %v2473 = vand.u32 %v499, 4294901760
        %v2474 = vsub.f32 %v499, %v2473
        %v2475 = vand.u32 %v2474, 4294901760
        %2476 = vmatpush2.msra.mxu0 %v2475
        %2477 = vmatprep.subr.mxu0 0.0
        %v2478 = vand.u32 %v498, 4294901760
        %v2479 = vsub.f32 %v498, %v2478
        %v2480 = vand.u32 %v2479, 4294901760
        %2481 = vmatpush2.msra.mxu0 %v2480
        %2482 = vmatprep.subr.mxu0 0.0
        %v2483 = vand.u32 %v497, 4294901760
        %v2484 = vsub.f32 %v497, %v2483
        %v2485 = vand.u32 %v2484, 4294901760
        %2486 = vmatpush2.msra.mxu0 %v2485
        %2487 = vmatprep.subr.mxu0 0.0
        %v2488 = vand.u32 %v496, 4294901760
        %v2489 = vsub.f32 %v496, %v2488
        %v2490 = vand.u32 %v2489, 4294901760
        %2491 = vmatpush2.msra.mxu0 %v2490
        %2492 = vmatprep.subr.mxu0 0.0
        %v2493 = vand.u32 %v495, 4294901760
        %v2494 = vsub.f32 %v495, %v2493
        %v2495 = vand.u32 %v2494, 4294901760
        %2496 = vmatpush2.msra.mxu0 %v2495
        %2497 = vmatprep.subr.mxu0 0.0
        %v2498 = vand.u32 %v494, 4294901760
        %v2499 = vsub.f32 %v494, %v2498
        %v2500 = vand.u32 %v2499, 4294901760
        %2501 = vmatpush2.msra.mxu0 %v2500
        %2502 = vmatprep.subr.mxu0 0.0
        %v2503 = vand.u32 %v493, 4294901760
        %v2504 = vsub.f32 %v493, %v2503
        %v2505 = vand.u32 %v2504, 4294901760
        %2506 = vmatpush2.msra.mxu0 %v2505
        %2507 = vmatprep.subr.mxu0 0.0
        %v2508 = vand.u32 %v492, 4294901760
        %v2509 = vsub.f32 %v492, %v2508
        %v2510 = vand.u32 %v2509, 4294901760
        %2511 = vmatpush2.msra.mxu0 %v2510
        %2512 = vmatprep.subr.mxu0 0.0
        %v2513 = vand.u32 %v491, 4294901760
        %v2514 = vsub.f32 %v491, %v2513
        %v2515 = vand.u32 %v2514, 4294901760
        %2516 = vmatpush2.msra.mxu0 %v2515
        %2517 = vmatprep.subr.mxu0 0.0
        %v2518 = vand.u32 %v490, 4294901760
        %v2519 = vsub.f32 %v490, %v2518
        %v2520 = vand.u32 %v2519, 4294901760
        %2521 = vmatpush2.msra.mxu0 %v2520
        %2522 = vmatprep.subr.mxu0 0.0
        %v2523 = vand.u32 %v489, 4294901760
        %v2524 = vsub.f32 %v489, %v2523
        %v2525 = vand.u32 %v2524, 4294901760
        %2526 = vmatpush2.msra.mxu0 %v2525
        %2527 = vmatprep.subr.mxu0 0.0
        %v2528 = vand.u32 %v488, 4294901760
        %v2529 = vsub.f32 %v488, %v2528
        %v2530 = vand.u32 %v2529, 4294901760
        %2531 = vmatpush2.msra.mxu0 %v2530
        %2532 = vmatprep.subr.mxu0 0.0
        %v2533 = vand.u32 %v487, 4294901760
        %v2534 = vsub.f32 %v487, %v2533
        %v2535 = vand.u32 %v2534, 4294901760
        %2536 = vmatpush2.msra.mxu0 %v2535
        %2537 = vmatprep.subr.mxu0 0.0
        %v2538 = vand.u32 %v486, 4294901760
        %v2539 = vsub.f32 %v486, %v2538
        %v2540 = vand.u32 %v2539, 4294901760
        %2541 = vmatpush2.msra.mxu0 %v2540
        %2542 = vmatprep.subr.mxu0 0.0
        %v2543 = vand.u32 %v485, 4294901760
        %v2544 = vsub.f32 %v485, %v2543
        %v2545 = vand.u32 %v2544, 4294901760
        %2546 = vmatpush2.msra.mxu0 %v2545
        %2547 = vmatprep.subr.mxu0 0.0
        %v2548 = vand.u32 %v484, 4294901760
        %v2549 = vsub.f32 %v484, %v2548
        %v2550 = vand.u32 %v2549, 4294901760
        %2551 = vmatpush2.msra.mxu0 %v2550
        %v2552 = vand.u32 %v405, 4294901760
        %2553 = vmatprep.mubr.f32.mxu0 %v2552
        %v2554 = vand.u32 %v404, 4294901760
        %2555 = vmatmul.mubr.f32.gmra.mxu0 %v2554
        %v2556 = vpop.f32.mrf.mxu0
        %v2557 = vadd.f32 %v2048, %v2556
        %v2558 = vpop.f32.mrf.mxu0
        %v2559 = vand.u32 %v407, 4294901760
        %2560 = vmatprep.mubr.f32.mxu0 %v2559
        %v2561 = vand.u32 %v406, 4294901760
        %2562 = vmatmul.mubr.f32.gmra.mxu0 %v2561
        %v2563 = vpop.f32.mrf.mxu0
        %v2564 = vadd.f32 %v2059, %v2563
        %v2565 = vpop.f32.mrf.mxu0
        %v2566 = vand.u32 %v409, 4294901760
        %2567 = vmatprep.mubr.f32.mxu0 %v2566
        %v2568 = vand.u32 %v408, 4294901760
        %2569 = vmatmul.mubr.f32.gmra.mxu0 %v2568
        %v2570 = vpop.f32.mrf.mxu0
        %v2571 = vadd.f32 %v2070, %v2570
        %v2572 = vpop.f32.mrf.mxu0
        %v2573 = vand.u32 %v411, 4294901760
        %2574 = vmatprep.mubr.f32.mxu0 %v2573
        %v2575 = vand.u32 %v410, 4294901760
        %2576 = vmatmul.mubr.f32.gmra.mxu0 %v2575
        %v2577 = vpop.f32.mrf.mxu0
        %v2578 = vadd.f32 %v2081, %v2577
        %v2579 = vpop.f32.mrf.mxu0
        %v2580 = vand.u32 %v413, 4294901760
        %2581 = vmatprep.mubr.f32.mxu0 %v2580
        %v2582 = vand.u32 %v412, 4294901760
        %2583 = vmatmul.mubr.f32.gmra.mxu0 %v2582
        %v2584 = vpop.f32.mrf.mxu0
        %v2585 = vadd.f32 %v2092, %v2584
        %v2586 = vpop.f32.mrf.mxu0
        %v2587 = vand.u32 %v415, 4294901760
        %2588 = vmatprep.mubr.f32.mxu0 %v2587
        %v2589 = vand.u32 %v414, 4294901760
        %2590 = vmatmul.mubr.f32.gmra.mxu0 %v2589
        %v2591 = vpop.f32.mrf.mxu0
        %v2592 = vadd.f32 %v2103, %v2591
        %v2593 = vpop.f32.mrf.mxu0
        %v2594 = vand.u32 %v417, 4294901760
        %2595 = vmatprep.mubr.f32.mxu0 %v2594
        %v2596 = vand.u32 %v416, 4294901760
        %2597 = vmatmul.mubr.f32.gmra.mxu0 %v2596
        %v2598 = vpop.f32.mrf.mxu0
        %v2599 = vadd.f32 %v2114, %v2598
        %v2600 = vpop.f32.mrf.mxu0
        %v2601 = vand.u32 %v419, 4294901760
        %2602 = vmatprep.mubr.f32.mxu0 %v2601
        %v2603 = vand.u32 %v418, 4294901760
        %2604 = vmatmul.mubr.f32.gmra.mxu0 %v2603
        %v2605 = vpop.f32.mrf.mxu0
        %v2606 = vadd.f32 %v2125, %v2605
        %v2607 = vpop.f32.mrf.mxu0
        %v2608 = vand.u32 %v421, 4294901760
        %2609 = vmatprep.mubr.f32.mxu0 %v2608
        %v2610 = vand.u32 %v420, 4294901760
        %2611 = vmatmul.mubr.f32.gmra.mxu0 %v2610
        %v2612 = vpop.f32.mrf.mxu0
        %v2613 = vadd.f32 %v2136, %v2612
        %v2614 = vpop.f32.mrf.mxu0
        %v2615 = vand.u32 %v423, 4294901760
        %2616 = vmatprep.mubr.f32.mxu0 %v2615
        %v2617 = vand.u32 %v422, 4294901760
        %2618 = vmatmul.mubr.f32.gmra.mxu0 %v2617
        %v2619 = vpop.f32.mrf.mxu0
        %v2620 = vadd.f32 %v2147, %v2619
        %v2621 = vpop.f32.mrf.mxu0
        %v2622 = vand.u32 %v425, 4294901760
        %2623 = vmatprep.mubr.f32.mxu0 %v2622
        %v2624 = vand.u32 %v424, 4294901760
        %2625 = vmatmul.mubr.f32.gmra.mxu0 %v2624
        %v2626 = vpop.f32.mrf.mxu0
        %v2627 = vadd.f32 %v2158, %v2626
        %v2628 = vpop.f32.mrf.mxu0
        %v2629 = vand.u32 %v427, 4294901760
        %2630 = vmatprep.mubr.f32.mxu0 %v2629
        %v2631 = vand.u32 %v426, 4294901760
        %2632 = vmatmul.mubr.f32.gmra.mxu0 %v2631
        %v2633 = vpop.f32.mrf.mxu0
        %v2634 = vadd.f32 %v2169, %v2633
        %v2635 = vpop.f32.mrf.mxu0
        %v2636 = vand.u32 %v429, 4294901760
        %2637 = vmatprep.mubr.f32.mxu0 %v2636
        %v2638 = vand.u32 %v428, 4294901760
        %2639 = vmatmul.mubr.f32.gmra.mxu0 %v2638
        %v2640 = vpop.f32.mrf.mxu0
        %v2641 = vadd.f32 %v2180, %v2640
        %v2642 = vpop.f32.mrf.mxu0
        %v2643 = vand.u32 %v431, 4294901760
        %2644 = vmatprep.mubr.f32.mxu0 %v2643
        %v2645 = vand.u32 %v430, 4294901760
        %2646 = vmatmul.mubr.f32.gmra.mxu0 %v2645
        %v2647 = vpop.f32.mrf.mxu0
        %v2648 = vadd.f32 %v2191, %v2647
        %v2649 = vpop.f32.mrf.mxu0
        %v2650 = vand.u32 %v433, 4294901760
        %2651 = vmatprep.mubr.f32.mxu0 %v2650
        %v2652 = vand.u32 %v432, 4294901760
        %2653 = vmatmul.mubr.f32.gmra.mxu0 %v2652
        %v2654 = vpop.f32.mrf.mxu0
        %v2655 = vadd.f32 %v2202, %v2654
        %v2656 = vpop.f32.mrf.mxu0
        %v2657 = vand.u32 %v435, 4294901760
        %2658 = vmatprep.mubr.f32.mxu0 %v2657
        %v2659 = vand.u32 %v434, 4294901760
        %2660 = vmatmul.mubr.f32.gmra.mxu0 %v2659
        %v2661 = vpop.f32.mrf.mxu0
        %v2662 = vadd.f32 %v2213, %v2661
        %v2663 = vpop.f32.mrf.mxu0
        %v2664 = vand.u32 %v437, 4294901760
        %2665 = vmatprep.mubr.f32.mxu0 %v2664
        %v2666 = vand.u32 %v436, 4294901760
        %2667 = vmatmul.mubr.f32.gmra.mxu0 %v2666
        %v2668 = vpop.f32.mrf.mxu0
        %v2669 = vadd.f32 %v2224, %v2668
        %v2670 = vpop.f32.mrf.mxu0
        %v2671 = vand.u32 %v439, 4294901760
        %2672 = vmatprep.mubr.f32.mxu0 %v2671
        %v2673 = vand.u32 %v438, 4294901760
        %2674 = vmatmul.mubr.f32.gmra.mxu0 %v2673
        %v2675 = vpop.f32.mrf.mxu0
        %v2676 = vadd.f32 %v2235, %v2675
        %v2677 = vpop.f32.mrf.mxu0
        %v2678 = vand.u32 %v441, 4294901760
        %2679 = vmatprep.mubr.f32.mxu0 %v2678
        %v2680 = vand.u32 %v440, 4294901760
        %2681 = vmatmul.mubr.f32.gmra.mxu0 %v2680
        %v2682 = vpop.f32.mrf.mxu0
        %v2683 = vadd.f32 %v2246, %v2682
        %v2684 = vpop.f32.mrf.mxu0
        %v2685 = vand.u32 %v443, 4294901760
        %2686 = vmatprep.mubr.f32.mxu0 %v2685
        %v2687 = vand.u32 %v442, 4294901760
        %2688 = vmatmul.mubr.f32.gmra.mxu0 %v2687
        %v2689 = vpop.f32.mrf.mxu0
        %v2690 = vadd.f32 %v2257, %v2689
        %v2691 = vpop.f32.mrf.mxu0
        %v2692 = vand.u32 %v445, 4294901760
        %2693 = vmatprep.mubr.f32.mxu0 %v2692
        %v2694 = vand.u32 %v444, 4294901760
        %2695 = vmatmul.mubr.f32.gmra.mxu0 %v2694
        %v2696 = vpop.f32.mrf.mxu0
        %v2697 = vadd.f32 %v2268, %v2696
        %v2698 = vpop.f32.mrf.mxu0
        %v2699 = vand.u32 %v447, 4294901760
        %2700 = vmatprep.mubr.f32.mxu0 %v2699
        %v2701 = vand.u32 %v446, 4294901760
        %2702 = vmatmul.mubr.f32.gmra.mxu0 %v2701
        %v2703 = vpop.f32.mrf.mxu0
        %v2704 = vadd.f32 %v2279, %v2703
        %v2705 = vpop.f32.mrf.mxu0
        %v2706 = vand.u32 %v449, 4294901760
        %2707 = vmatprep.mubr.f32.mxu0 %v2706
        %v2708 = vand.u32 %v448, 4294901760
        %2709 = vmatmul.mubr.f32.gmra.mxu0 %v2708
        %v2710 = vpop.f32.mrf.mxu0
        %v2711 = vadd.f32 %v2290, %v2710
        %v2712 = vpop.f32.mrf.mxu0
        %v2713 = vand.u32 %v451, 4294901760
        %2714 = vmatprep.mubr.f32.mxu0 %v2713
        %v2715 = vand.u32 %v450, 4294901760
        %2716 = vmatmul.mubr.f32.gmra.mxu0 %v2715
        %v2717 = vpop.f32.mrf.mxu0
        %v2718 = vadd.f32 %v2301, %v2717
        %v2719 = vpop.f32.mrf.mxu0
        %v2720 = vand.u32 %v453, 4294901760
        %2721 = vmatprep.mubr.f32.mxu0 %v2720
        %v2722 = vand.u32 %v452, 4294901760
        %2723 = vmatmul.mubr.f32.gmra.mxu0 %v2722
        %v2724 = vpop.f32.mrf.mxu0
        %v2725 = vadd.f32 %v2312, %v2724
        %v2726 = vpop.f32.mrf.mxu0
        %v2727 = vand.u32 %v455, 4294901760
        %2728 = vmatprep.mubr.f32.mxu0 %v2727
        %v2729 = vand.u32 %v454, 4294901760
        %2730 = vmatmul.mubr.f32.gmra.mxu0 %v2729
        %v2731 = vpop.f32.mrf.mxu0
        %v2732 = vadd.f32 %v2323, %v2731
        %v2733 = vpop.f32.mrf.mxu0
        %v2734 = vand.u32 %v457, 4294901760
        %2735 = vmatprep.mubr.f32.mxu0 %v2734
        %v2736 = vand.u32 %v456, 4294901760
        %2737 = vmatmul.mubr.f32.gmra.mxu0 %v2736
        %v2738 = vpop.f32.mrf.mxu0
        %v2739 = vadd.f32 %v2334, %v2738
        %v2740 = vpop.f32.mrf.mxu0
        %v2741 = vand.u32 %v459, 4294901760
        %2742 = vmatprep.mubr.f32.mxu0 %v2741
        %v2743 = vand.u32 %v458, 4294901760
        %2744 = vmatmul.mubr.f32.gmra.mxu0 %v2743
        %v2745 = vpop.f32.mrf.mxu0
        %v2746 = vadd.f32 %v2345, %v2745
        %v2747 = vpop.f32.mrf.mxu0
        %v2748 = vand.u32 %v461, 4294901760
        %2749 = vmatprep.mubr.f32.mxu0 %v2748
        %v2750 = vand.u32 %v460, 4294901760
        %2751 = vmatmul.mubr.f32.gmra.mxu0 %v2750
        %v2752 = vpop.f32.mrf.mxu0
        %v2753 = vadd.f32 %v2356, %v2752
        %v2754 = vpop.f32.mrf.mxu0
        %v2755 = vand.u32 %v463, 4294901760
        %2756 = vmatprep.mubr.f32.mxu0 %v2755
        %v2757 = vand.u32 %v462, 4294901760
        %2758 = vmatmul.mubr.f32.gmra.mxu0 %v2757
        %v2759 = vpop.f32.mrf.mxu0
        %v2760 = vadd.f32 %v2367, %v2759
        %v2761 = vpop.f32.mrf.mxu0
        %v2762 = vand.u32 %v465, 4294901760
        %2763 = vmatprep.mubr.f32.mxu0 %v2762
        %v2764 = vand.u32 %v464, 4294901760
        %2765 = vmatmul.mubr.f32.gmra.mxu0 %v2764
        %v2766 = vpop.f32.mrf.mxu0
        %v2767 = vadd.f32 %v2378, %v2766
        %v2768 = vpop.f32.mrf.mxu0
        %v2769 = vand.u32 %v467, 4294901760
        %2770 = vmatprep.mubr.f32.mxu0 %v2769
        %v2771 = vand.u32 %v466, 4294901760
        %2772 = vmatmul.mubr.f32.gmra.mxu0 %v2771
        %v2773 = vpop.f32.mrf.mxu0
        %v2774 = vadd.f32 %v2389, %v2773
        %v2775 = vpop.f32.mrf.mxu0
        %2776 = vdwg.mxu0
        %2777 = vmatprep.subr.mxu0 0.0
        %v2778 = vand.u32 %v483, 4294901760
        %2779 = vmatpush1.msra.mxu0 %v2778
        %2780 = vmatprep.subr.mxu0 0.0
        %v2781 = vand.u32 %v482, 4294901760
        %2782 = vmatpush1.msra.mxu0 %v2781
        %2783 = vmatprep.subr.mxu0 0.0
        %v2784 = vand.u32 %v481, 4294901760
        %2785 = vmatpush1.msra.mxu0 %v2784
        %2786 = vmatprep.subr.mxu0 0.0
        %v2787 = vand.u32 %v480, 4294901760
        %2788 = vmatpush1.msra.mxu0 %v2787
        %2789 = vmatprep.subr.mxu0 0.0
        %v2790 = vand.u32 %v479, 4294901760
        %2791 = vmatpush1.msra.mxu0 %v2790
        %2792 = vmatprep.subr.mxu0 0.0
        %v2793 = vand.u32 %v478, 4294901760
        %2794 = vmatpush1.msra.mxu0 %v2793
        %2795 = vmatprep.subr.mxu0 0.0
        %v2796 = vand.u32 %v477, 4294901760
        %2797 = vmatpush1.msra.mxu0 %v2796
        %2798 = vmatprep.subr.mxu0 0.0
        %v2799 = vand.u32 %v476, 4294901760
        %2800 = vmatpush1.msra.mxu0 %v2799
        %2801 = vmatprep.subr.mxu0 0.0
        %v2802 = vand.u32 %v475, 4294901760
        %2803 = vmatpush1.msra.mxu0 %v2802
        %2804 = vmatprep.subr.mxu0 0.0
        %v2805 = vand.u32 %v474, 4294901760
        %2806 = vmatpush1.msra.mxu0 %v2805
        %2807 = vmatprep.subr.mxu0 0.0
        %v2808 = vand.u32 %v473, 4294901760
        %2809 = vmatpush1.msra.mxu0 %v2808
        %2810 = vmatprep.subr.mxu0 0.0
        %v2811 = vand.u32 %v472, 4294901760
        %2812 = vmatpush1.msra.mxu0 %v2811
        %2813 = vmatprep.subr.mxu0 0.0
        %v2814 = vand.u32 %v471, 4294901760
        %2815 = vmatpush1.msra.mxu0 %v2814
        %2816 = vmatprep.subr.mxu0 0.0
        %v2817 = vand.u32 %v470, 4294901760
        %2818 = vmatpush1.msra.mxu0 %v2817
        %2819 = vmatprep.subr.mxu0 0.0
        %v2820 = vand.u32 %v469, 4294901760
        %2821 = vmatpush1.msra.mxu0 %v2820
        %2822 = vmatprep.subr.mxu0 0.0
        %v2823 = vand.u32 %v468, 4294901760
        %2824 = vmatpush1.msra.mxu0 %v2823
        %2825 = vmatprep.subr.mxu0 0.0
        %v2826 = vand.u32 %v499, 4294901760
        %2827 = vmatpush2.msra.mxu0 %v2826
        %2828 = vmatprep.subr.mxu0 0.0
        %v2829 = vand.u32 %v498, 4294901760
        %2830 = vmatpush2.msra.mxu0 %v2829
        %2831 = vmatprep.subr.mxu0 0.0
        %v2832 = vand.u32 %v497, 4294901760
        %2833 = vmatpush2.msra.mxu0 %v2832
        %2834 = vmatprep.subr.mxu0 0.0
        %v2835 = vand.u32 %v496, 4294901760
        %2836 = vmatpush2.msra.mxu0 %v2835
        %2837 = vmatprep.subr.mxu0 0.0
        %v2838 = vand.u32 %v495, 4294901760
        %2839 = vmatpush2.msra.mxu0 %v2838
        %2840 = vmatprep.subr.mxu0 0.0
        %v2841 = vand.u32 %v494, 4294901760
        %2842 = vmatpush2.msra.mxu0 %v2841
        %2843 = vmatprep.subr.mxu0 0.0
        %v2844 = vand.u32 %v493, 4294901760
        %2845 = vmatpush2.msra.mxu0 %v2844
        %2846 = vmatprep.subr.mxu0 0.0
        %v2847 = vand.u32 %v492, 4294901760
        %2848 = vmatpush2.msra.mxu0 %v2847
        %2849 = vmatprep.subr.mxu0 0.0
        %v2850 = vand.u32 %v491, 4294901760
        %2851 = vmatpush2.msra.mxu0 %v2850
        %2852 = vmatprep.subr.mxu0 0.0
        %v2853 = vand.u32 %v490, 4294901760
        %2854 = vmatpush2.msra.mxu0 %v2853
        %2855 = vmatprep.subr.mxu0 0.0
        %v2856 = vand.u32 %v489, 4294901760
        %2857 = vmatpush2.msra.mxu0 %v2856
        %2858 = vmatprep.subr.mxu0 0.0
        %v2859 = vand.u32 %v488, 4294901760
        %2860 = vmatpush2.msra.mxu0 %v2859
        %2861 = vmatprep.subr.mxu0 0.0
        %v2862 = vand.u32 %v487, 4294901760
        %2863 = vmatpush2.msra.mxu0 %v2862
        %2864 = vmatprep.subr.mxu0 0.0
        %v2865 = vand.u32 %v486, 4294901760
        %2866 = vmatpush2.msra.mxu0 %v2865
        %2867 = vmatprep.subr.mxu0 0.0
        %v2868 = vand.u32 %v485, 4294901760
        %2869 = vmatpush2.msra.mxu0 %v2868
        %2870 = vmatprep.subr.mxu0 0.0
        %v2871 = vand.u32 %v484, 4294901760
        %2872 = vmatpush2.msra.mxu0 %v2871
        %v2873 = vand.u32 %v405, 4294901760
        %2874 = vmatprep.mubr.f32.mxu0 %v2873
        %v2875 = vand.u32 %v404, 4294901760
        %2876 = vmatmul.mubr.f32.gmra.mxu0 %v2875
        %v2877 = vpop.f32.mrf.mxu0
        %v2878 = vadd.f32 %v2557, %v2877
        %v2879 = vpop.f32.mrf.mxu0
        %v2880 = vand.u32 %v407, 4294901760
        %2881 = vmatprep.mubr.f32.mxu0 %v2880
        %v2882 = vand.u32 %v406, 4294901760
        %2883 = vmatmul.mubr.f32.gmra.mxu0 %v2882
        %v2884 = vpop.f32.mrf.mxu0
        %v2885 = vadd.f32 %v2564, %v2884
        %v2886 = vpop.f32.mrf.mxu0
        %v2887 = vand.u32 %v409, 4294901760
        %2888 = vmatprep.mubr.f32.mxu0 %v2887
        %v2889 = vand.u32 %v408, 4294901760
        %2890 = vmatmul.mubr.f32.gmra.mxu0 %v2889
        %v2891 = vpop.f32.mrf.mxu0
        %v2892 = vadd.f32 %v2571, %v2891
        %v2893 = vpop.f32.mrf.mxu0
        %v2894 = vand.u32 %v411, 4294901760
        %2895 = vmatprep.mubr.f32.mxu0 %v2894
        %v2896 = vand.u32 %v410, 4294901760
        %2897 = vmatmul.mubr.f32.gmra.mxu0 %v2896
        %v2898 = vpop.f32.mrf.mxu0
        %v2899 = vadd.f32 %v2578, %v2898
        %v2900 = vpop.f32.mrf.mxu0
        %v2901 = vand.u32 %v413, 4294901760
        %2902 = vmatprep.mubr.f32.mxu0 %v2901
        %v2903 = vand.u32 %v412, 4294901760
        %2904 = vmatmul.mubr.f32.gmra.mxu0 %v2903
        %v2905 = vpop.f32.mrf.mxu0
        %v2906 = vadd.f32 %v2585, %v2905
        %v2907 = vpop.f32.mrf.mxu0
        %v2908 = vand.u32 %v415, 4294901760
        %2909 = vmatprep.mubr.f32.mxu0 %v2908
        %v2910 = vand.u32 %v414, 4294901760
        %2911 = vmatmul.mubr.f32.gmra.mxu0 %v2910
        %v2912 = vpop.f32.mrf.mxu0
        %v2913 = vadd.f32 %v2592, %v2912
        %v2914 = vpop.f32.mrf.mxu0
        %v2915 = vand.u32 %v417, 4294901760
        %2916 = vmatprep.mubr.f32.mxu0 %v2915
        %v2917 = vand.u32 %v416, 4294901760
        %2918 = vmatmul.mubr.f32.gmra.mxu0 %v2917
        %v2919 = vpop.f32.mrf.mxu0
        %v2920 = vadd.f32 %v2599, %v2919
        %v2921 = vpop.f32.mrf.mxu0
        %v2922 = vand.u32 %v419, 4294901760
        %2923 = vmatprep.mubr.f32.mxu0 %v2922
        %v2924 = vand.u32 %v418, 4294901760
        %2925 = vmatmul.mubr.f32.gmra.mxu0 %v2924
        %v2926 = vpop.f32.mrf.mxu0
        %v2927 = vadd.f32 %v2606, %v2926
        %v2928 = vpop.f32.mrf.mxu0
        %v2929 = vand.u32 %v421, 4294901760
        %2930 = vmatprep.mubr.f32.mxu0 %v2929
        %v2931 = vand.u32 %v420, 4294901760
        %2932 = vmatmul.mubr.f32.gmra.mxu0 %v2931
        %v2933 = vpop.f32.mrf.mxu0
        %v2934 = vadd.f32 %v2613, %v2933
        %v2935 = vpop.f32.mrf.mxu0
        %v2936 = vand.u32 %v423, 4294901760
        %2937 = vmatprep.mubr.f32.mxu0 %v2936
        %v2938 = vand.u32 %v422, 4294901760
        %2939 = vmatmul.mubr.f32.gmra.mxu0 %v2938
        %v2940 = vpop.f32.mrf.mxu0
        %v2941 = vadd.f32 %v2620, %v2940
        %v2942 = vpop.f32.mrf.mxu0
        %v2943 = vand.u32 %v425, 4294901760
        %2944 = vmatprep.mubr.f32.mxu0 %v2943
        %v2945 = vand.u32 %v424, 4294901760
        %2946 = vmatmul.mubr.f32.gmra.mxu0 %v2945
        %v2947 = vpop.f32.mrf.mxu0
        %v2948 = vadd.f32 %v2627, %v2947
        %v2949 = vpop.f32.mrf.mxu0
        %v2950 = vand.u32 %v427, 4294901760
        %2951 = vmatprep.mubr.f32.mxu0 %v2950
        %v2952 = vand.u32 %v426, 4294901760
        %2953 = vmatmul.mubr.f32.gmra.mxu0 %v2952
        %v2954 = vpop.f32.mrf.mxu0
        %v2955 = vadd.f32 %v2634, %v2954
        %v2956 = vpop.f32.mrf.mxu0
        %v2957 = vand.u32 %v429, 4294901760
        %2958 = vmatprep.mubr.f32.mxu0 %v2957
        %v2959 = vand.u32 %v428, 4294901760
        %2960 = vmatmul.mubr.f32.gmra.mxu0 %v2959
        %v2961 = vpop.f32.mrf.mxu0
        %v2962 = vadd.f32 %v2641, %v2961
        %v2963 = vpop.f32.mrf.mxu0
        %v2964 = vand.u32 %v431, 4294901760
        %2965 = vmatprep.mubr.f32.mxu0 %v2964
        %v2966 = vand.u32 %v430, 4294901760
        %2967 = vmatmul.mubr.f32.gmra.mxu0 %v2966
        %v2968 = vpop.f32.mrf.mxu0
        %v2969 = vadd.f32 %v2648, %v2968
        %v2970 = vpop.f32.mrf.mxu0
        %v2971 = vand.u32 %v433, 4294901760
        %2972 = vmatprep.mubr.f32.mxu0 %v2971
        %v2973 = vand.u32 %v432, 4294901760
        %2974 = vmatmul.mubr.f32.gmra.mxu0 %v2973
        %v2975 = vpop.f32.mrf.mxu0
        %v2976 = vadd.f32 %v2655, %v2975
        %v2977 = vpop.f32.mrf.mxu0
        %v2978 = vand.u32 %v435, 4294901760
        %2979 = vmatprep.mubr.f32.mxu0 %v2978
        %v2980 = vand.u32 %v434, 4294901760
        %2981 = vmatmul.mubr.f32.gmra.mxu0 %v2980
        %v2982 = vpop.f32.mrf.mxu0
        %v2983 = vadd.f32 %v2662, %v2982
        %v2984 = vpop.f32.mrf.mxu0
        %v2985 = vand.u32 %v437, 4294901760
        %2986 = vmatprep.mubr.f32.mxu0 %v2985
        %v2987 = vand.u32 %v436, 4294901760
        %2988 = vmatmul.mubr.f32.gmra.mxu0 %v2987
        %v2989 = vpop.f32.mrf.mxu0
        %v2990 = vadd.f32 %v2669, %v2989
        %v2991 = vpop.f32.mrf.mxu0
        %v2992 = vand.u32 %v439, 4294901760
        %2993 = vmatprep.mubr.f32.mxu0 %v2992
        %v2994 = vand.u32 %v438, 4294901760
        %2995 = vmatmul.mubr.f32.gmra.mxu0 %v2994
        %v2996 = vpop.f32.mrf.mxu0
        %v2997 = vadd.f32 %v2676, %v2996
        %v2998 = vpop.f32.mrf.mxu0
        %v2999 = vand.u32 %v441, 4294901760
        %3000 = vmatprep.mubr.f32.mxu0 %v2999
        %v3001 = vand.u32 %v440, 4294901760
        %3002 = vmatmul.mubr.f32.gmra.mxu0 %v3001
        %v3003 = vpop.f32.mrf.mxu0
        %v3004 = vadd.f32 %v2683, %v3003
        %v3005 = vpop.f32.mrf.mxu0
        %v3006 = vand.u32 %v443, 4294901760
        %3007 = vmatprep.mubr.f32.mxu0 %v3006
        %v3008 = vand.u32 %v442, 4294901760
        %3009 = vmatmul.mubr.f32.gmra.mxu0 %v3008
        %v3010 = vpop.f32.mrf.mxu0
        %v3011 = vadd.f32 %v2690, %v3010
        %v3012 = vpop.f32.mrf.mxu0
        %v3013 = vand.u32 %v445, 4294901760
        %3014 = vmatprep.mubr.f32.mxu0 %v3013
        %v3015 = vand.u32 %v444, 4294901760
        %3016 = vmatmul.mubr.f32.gmra.mxu0 %v3015
        %v3017 = vpop.f32.mrf.mxu0
        %v3018 = vadd.f32 %v2697, %v3017
        %v3019 = vpop.f32.mrf.mxu0
        %v3020 = vand.u32 %v447, 4294901760
        %3021 = vmatprep.mubr.f32.mxu0 %v3020
        %v3022 = vand.u32 %v446, 4294901760
        %3023 = vmatmul.mubr.f32.gmra.mxu0 %v3022
        %v3024 = vpop.f32.mrf.mxu0
        %v3025 = vadd.f32 %v2704, %v3024
        %v3026 = vpop.f32.mrf.mxu0
        %v3027 = vand.u32 %v449, 4294901760
        %3028 = vmatprep.mubr.f32.mxu0 %v3027
        %v3029 = vand.u32 %v448, 4294901760
        %3030 = vmatmul.mubr.f32.gmra.mxu0 %v3029
        %v3031 = vpop.f32.mrf.mxu0
        %v3032 = vadd.f32 %v2711, %v3031
        %v3033 = vpop.f32.mrf.mxu0
        %v3034 = vand.u32 %v451, 4294901760
        %3035 = vmatprep.mubr.f32.mxu0 %v3034
        %v3036 = vand.u32 %v450, 4294901760
        %3037 = vmatmul.mubr.f32.gmra.mxu0 %v3036
        %v3038 = vpop.f32.mrf.mxu0
        %v3039 = vadd.f32 %v2718, %v3038
        %v3040 = vpop.f32.mrf.mxu0
        %v3041 = vand.u32 %v453, 4294901760
        %3042 = vmatprep.mubr.f32.mxu0 %v3041
        %v3043 = vand.u32 %v452, 4294901760
        %3044 = vmatmul.mubr.f32.gmra.mxu0 %v3043
        %v3045 = vpop.f32.mrf.mxu0
        %v3046 = vadd.f32 %v2725, %v3045
        %v3047 = vpop.f32.mrf.mxu0
        %v3048 = vand.u32 %v455, 4294901760
        %3049 = vmatprep.mubr.f32.mxu0 %v3048
        %v3050 = vand.u32 %v454, 4294901760
        %3051 = vmatmul.mubr.f32.gmra.mxu0 %v3050
        %v3052 = vpop.f32.mrf.mxu0
        %v3053 = vadd.f32 %v2732, %v3052
        %v3054 = vpop.f32.mrf.mxu0
        %v3055 = vand.u32 %v457, 4294901760
        %3056 = vmatprep.mubr.f32.mxu0 %v3055
        %v3057 = vand.u32 %v456, 4294901760
        %3058 = vmatmul.mubr.f32.gmra.mxu0 %v3057
        %v3059 = vpop.f32.mrf.mxu0
        %v3060 = vadd.f32 %v2739, %v3059
        %v3061 = vpop.f32.mrf.mxu0
        %v3062 = vand.u32 %v459, 4294901760
        %3063 = vmatprep.mubr.f32.mxu0 %v3062
        %v3064 = vand.u32 %v458, 4294901760
        %3065 = vmatmul.mubr.f32.gmra.mxu0 %v3064
        %v3066 = vpop.f32.mrf.mxu0
        %v3067 = vadd.f32 %v2746, %v3066
        %v3068 = vpop.f32.mrf.mxu0
        %v3069 = vand.u32 %v461, 4294901760
        %3070 = vmatprep.mubr.f32.mxu0 %v3069
        %v3071 = vand.u32 %v460, 4294901760
        %3072 = vmatmul.mubr.f32.gmra.mxu0 %v3071
        %v3073 = vpop.f32.mrf.mxu0
        %v3074 = vadd.f32 %v2753, %v3073
        %v3075 = vpop.f32.mrf.mxu0
        %v3076 = vand.u32 %v463, 4294901760
        %3077 = vmatprep.mubr.f32.mxu0 %v3076
        %v3078 = vand.u32 %v462, 4294901760
        %3079 = vmatmul.mubr.f32.gmra.mxu0 %v3078
        %v3080 = vpop.f32.mrf.mxu0
        %v3081 = vadd.f32 %v2760, %v3080
        %v3082 = vpop.f32.mrf.mxu0
        %v3083 = vand.u32 %v465, 4294901760
        %3084 = vmatprep.mubr.f32.mxu0 %v3083
        %v3085 = vand.u32 %v464, 4294901760
        %3086 = vmatmul.mubr.f32.gmra.mxu0 %v3085
        %v3087 = vpop.f32.mrf.mxu0
        %v3088 = vadd.f32 %v2767, %v3087
        %v3089 = vpop.f32.mrf.mxu0
        %v3090 = vand.u32 %v467, 4294901760
        %3091 = vmatprep.mubr.f32.mxu0 %v3090
        %v3092 = vand.u32 %v466, 4294901760
        %3093 = vmatmul.mubr.f32.gmra.mxu0 %v3092
        %v3094 = vpop.f32.mrf.mxu0
        %v3095 = vadd.f32 %v2774, %v3094
        %v3096 = vpop.f32.mrf.mxu0
        %3097 = vdwg.mxu0
        %3098 = vst [vmem:[%s137] sm:$0xff] %v2878
        %3099 = vst [vmem:[%s137 + $0x8] sm:$0xff] %v2885
        %3100 = vst [vmem:[%s137 + $0x10] sm:$0xff] %v2892
        %3101 = vst [vmem:[%s137 + $0x18] sm:$0xff] %v2899
        %3102 = vst [vmem:[%s137 + $0x20] sm:$0xff] %v2906
        %3103 = vst [vmem:[%s137 + $0x28] sm:$0xff] %v2913
        %3104 = vst [vmem:[%s137 + $0x30] sm:$0xff] %v2920
        %3105 = vst [vmem:[%s137 + $0x38] sm:$0xff] %v2927
        %3106 = vst [vmem:[%s137 + $0x40] sm:$0xff] %v2934
        %3107 = vst [vmem:[%s137 + $0x48] sm:$0xff] %v2941
        %3108 = vst [vmem:[%s137 + $0x50] sm:$0xff] %v2948
        %3109 = vst [vmem:[%s137 + $0x58] sm:$0xff] %v2955
        %3110 = vst [vmem:[%s137 + $0x60] sm:$0xff] %v2962
        %3111 = vst [vmem:[%s137 + $0x68] sm:$0xff] %v2969
        %3112 = vst [vmem:[%s137 + $0x70] sm:$0xff] %v2976
        %3113 = vst [vmem:[%s137 + $0x78] sm:$0xff] %v2983
        %3114 = vst [vmem:[%s137 + $0x80] sm:$0xff] %v2990
        %3115 = vst [vmem:[%s137 + $0x88] sm:$0xff] %v2997
        %3116 = vst [vmem:[%s137 + $0x90] sm:$0xff] %v3004
        %3117 = vst [vmem:[%s137 + $0x98] sm:$0xff] %v3011
        %3118 = vst [vmem:[%s137 + $0xa0] sm:$0xff] %v3018
        %3119 = vst [vmem:[%s137 + $0xa8] sm:$0xff] %v3025
        %3120 = vst [vmem:[%s137 + $0xb0] sm:$0xff] %v3032
        %3121 = vst [vmem:[%s137 + $0xb8] sm:$0xff] %v3039
        %3122 = vst [vmem:[%s137 + $0xc0] sm:$0xff] %v3046
        %3123 = vst [vmem:[%s137 + $0xc8] sm:$0xff] %v3053
        %3124 = vst [vmem:[%s137 + $0xd0] sm:$0xff] %v3060
        %3125 = vst [vmem:[%s137 + $0xd8] sm:$0xff] %v3067
        %3126 = vst [vmem:[%s137 + $0xe0] sm:$0xff] %v3074
        %3127 = vst [vmem:[%s137 + $0xe8] sm:$0xff] %v3081
        %3128 = vst [vmem:[%s137 + $0xf0] sm:$0xff] %v3088
        %3129 = vst [vmem:[%s137 + $0xf8] sm:$0xff] %v3095
        %s3130 = sand.u32 %s71, 1
        %s3131 = scalar_lea.sflag [#allocation3], %s3130
        %s3132 = sand.u32 %s71, 1
        %s3133 = smul.addr %s3132, 256
        %s3134 = scalar_lea.vmem [#allocation2], %s3133
        // Predicated region
        $region29: #{tpu_custom_call.1} parent=27 // pred_check
          %p3135 = pneg %p81
        $region30: #{tpu_custom_call.1} parent=27 // pred_check_branch
          %3137 = sbr.rel (%p3135) target = $region32
        $region31: #{tpu_custom_call.1} parent=27 // pred_region
          %s3138 = smul.u32 32, %s16
          %s3140 = ssub.s32 4096, 4096
          %3141 = vsyncadd %s3131, %s3140
          %s3142 = smul.addr %s3138, 128
          %s3143 = scalar_lea.hbm %s2, %s3142
          %s3144 = sshll.u32 %s3134, 4
          %s3145 = int_to_ptr.vmem [resolvable:$true] %s3144
          %3150 = dma.vmem_to_hbm [thread:$0]  %s3145, 4096, %s3143, %s3131, 128, 128, 8
        $region32: #{tpu_custom_call.1} parent=27 // pred_fallthru
          _
      $region28: #{tpu_custom_call.1} parent=5 // pred_fallthru
        _
      %p3151 = scmp.le.s32.totalorder 2, %s11
      // Predicated region
      $region33: #{tpu_custom_call.1} parent=5 // pred_check
        %p3152 = pneg %p3151
      $region34: #{tpu_custom_call.1} parent=5 // pred_check_branch
        %3154 = sbr.rel (%p3152) target = $region36
      $region35: #{tpu_custom_call.1} parent=5 // pred_region
        %s3155 = ssub.s32 %s11, 2
        // Predicated region
        $region37: #{tpu_custom_call.1} parent=35 // pred_check
          %p3156 = pneg %p87
        $region38: #{tpu_custom_call.1} parent=35 // pred_check_branch
          %3158 = sbr.rel (%p3156) target = $region40
        $region39: #{tpu_custom_call.1} parent=35 // pred_region
          %s3159 = sand.u32 %s72, 1
          %s3160 = scalar_lea.sflag [#allocation3], %s3159
          %s3161 = sand.u32 %s72, 1
          %s3162 = smul.addr %s3161, 256
          %s3163 = scalar_lea.vmem [#allocation2], %s3162
          %3164 = dma.done %s3160, 4096
        $region40: #{tpu_custom_call.1} parent=35 // pred_fallthru
          _
      $region36: #{tpu_custom_call.1} parent=5 // pred_fallthru
        _
    $region6: #{tpu_custom_call.1} parent=1 // loop_footer
      %s15 = sadd.s32 1, %s11
    $region7: #{tpu_custom_call.1} parent=1 // loop_footer_branch
      %10 = sbr.rel target = $region3
    $region8: #{tpu_custom_call.1} parent=1 // loop_exit
      _
    %3165 = vsyncpa [#allocation3], 1
    %s3166 = scalar_lea.sflag [#allocation3], 1
    %3167 = vsyncpa %s3166, 1

</llo_original>
